<compile_context>
chip_gen: v7x
topology: tpu7x:2x2x1
jax: 0.10.0
libtpu: 0.0.40
codegen_flags: <defaults>
</compile_context>

<pallas_src>
import jax
import jax.numpy as jnp
from jax.experimental import pallas as pl
from jax.experimental.pallas import tpu as pltpu


def _round_up(x, m):
    return (x + m - 1) // m * m


def mlp_kernel(x_ref, w1_ref, b1_ref, w2_ref, b2_ref,
               w3_ref, b3_ref, w4_ref, b4_ref, o_ref):
    # Layer 1: Linear + ReLU   (Dropout(0.5) == identity at inference)
    h = jnp.dot(x_ref[...], w1_ref[...],
                preferred_element_type=jnp.float32) + b1_ref[...]
    h = jnp.maximum(h, 0.0)
    # Layer 2: Linear + ReLU   (Dropout(0.3) == identity at inference)
    h = jnp.dot(h.astype(jnp.bfloat16), w2_ref[...],
                preferred_element_type=jnp.float32) + b2_ref[...]
    h = jnp.maximum(h, 0.0)
    # Layer 3: Linear + ReLU   (Dropout(0.2) == identity at inference)
    h = jnp.dot(h.astype(jnp.bfloat16), w3_ref[...],
                preferred_element_type=jnp.float32) + b3_ref[...]
    h = jnp.maximum(h, 0.0)
    # Layer 4: Linear (logits)
    o_ref[...] = jnp.dot(h.astype(jnp.bfloat16), w4_ref[...],
                         preferred_element_type=jnp.float32) + b4_ref[...]
    # TODO(synk): training-mode dropout (Bernoulli masking) is omitted; eval
    # semantics (identity) are implemented, matching model.eval() inference.


def _choose_tm(B):
    """Batch tile rows.

    - tiny batch: one tile (block dim == full array dim is always legal);
    - otherwise: >=2 tiles (feeds both v7x TensorCores), 16-row aligned for
      bf16 sublane packing, capped at 1024 rows (VMEM footprint stays a few MB
      against 64 MiB v7x / 128 MiB v5e-v6e budgets).
    """
    if B <= 16:
        return B
    return min(1024, _round_up(pl.cdiv(B, 2), 16))


@jax.jit
def mlp_forward(x_nchw, params):
    """Runs the fused MLP Pallas kernel.

    x_nchw : (B, C, H, W) array
    params : dict of pre-transposed bf16 weights (in, out) / f32 biases (1, out)
             with exact (unpadded) dims — see make_params.
    """
    B = x_nchw.shape[0]
    # Row-major flatten == torch .view; single cast, no padding copies.
    x = x_nchw.reshape(B, -1).astype(jnp.bfloat16)
    D_raw = x.shape[1]
    out_dim = params["w4"].shape[1]

    TM = _choose_tm(B)
    grid = (pl.cdiv(B, TM),)

    def resident(arr):
        # Constant index_map -> block stays VMEM-resident; no re-DMA per step.
        return pl.BlockSpec(arr.shape, lambda i: (0,) * arr.ndim)

    out = pl.pallas_call(
        mlp_kernel,
        out_shape=jax.ShapeDtypeStruct((B, out_dim), jnp.float32),
        grid=grid,
        in_specs=[
            pl.BlockSpec((TM, D_raw), lambda i: (i, 0)),
            resident(params["w1"]), resident(params["b1"]),
            resident(params["w2"]), resident(params["b2"]),
            resident(params["w3"]), resident(params["b3"]),
            resident(params["w4"]), resident(params["b4"]),
        ],
        out_specs=pl.BlockSpec((TM, out_dim), lambda i: (i, 0)),
        compiler_params=pltpu.CompilerParams(
            dimension_semantics=("parallel",)),
    )(x, params["w1"], params["b1"], params["w2"], params["b2"],
      params["w3"], params["b3"], params["w4"], params["b4"])

    return out


def make_params(key, input_dim, hidden_dim=(512, 128, 32, 5)):
    """Deterministic PyTorch-style (Kaiming-uniform-ish) init.

    Returns (kernel_params, ref_params):
      kernel_params : weights transposed to (in, out), bfloat16, EXACT dims
                      (no padding); biases as (1, out) float32.
      ref_params    : original f32 (out, in) weights and (out,) biases for the
                      pure-JAX reference.
    """
    dims = (input_dim,) + tuple(hidden_dim)
    kernel_params, ref_params = {}, {}
    for li in range(4):
        fan_in, fan_out = dims[li], dims[li + 1]
        key, kw, kb = jax.random.split(key, 3)
        bound = 1.0 / (fan_in ** 0.5)
        w = jax.random.uniform(kw, (fan_out, fan_in), jnp.float32, -bound, bound)
        b = jax.random.uniform(kb, (fan_out,), jnp.float32, -bound, bound)
        ref_params[f"w{li+1}"] = w
        ref_params[f"b{li+1}"] = b
        kernel_params[f"w{li+1}"] = w.T.astype(jnp.bfloat16)   # (in, out) bf16
        kernel_params[f"b{li+1}"] = b[None, :]                  # (1, out) f32
    return kernel_params, ref_params


def mlp_reference(x_nchw, ref_params):
    """Pure-JAX f32 reference (eval mode) for correctness checking."""
    B = x_nchw.shape[0]
    h = x_nchw.reshape(B, -1)
    for li in range(4):
        w = ref_params[f"w{li+1}"]
        b = ref_params[f"b{li+1}"]
        h = h @ w.T + b
        if li < 3:
            h = jnp.maximum(h, 0.0)
    return h


if __name__ == "__main__":
    # Small, module-consistent shapes. 3*15*15 = 675 is NOT a multiple of 128,
    # so the unpadded-K (exact contraction dim) path is exercised.
    B, C, H, W = 2, 3, 15, 15
    hidden = (512, 128, 32, 5)
    input_dim = C * H * W

    key = jax.random.PRNGKey(0)
    key, kx = jax.random.split(key)
    x = jax.random.normal(kx, (B, C, H, W), jnp.float32)

    kernel_params, ref_params = make_params(key, input_dim, hidden)

    out = mlp_forward(x, kernel_params)
    out = jax.block_until_ready(out)

    ref = mlp_reference(x, ref_params)
    assert out.shape == (B, hidden[-1]), out.shape
    # bf16 weights/activations in the kernel vs f32 reference -> loosened tolerance.
    max_err = float(jnp.max(jnp.abs(out - ref)))
    assert jnp.allclose(out, ref, atol=5e-2, rtol=5e-2), f"mismatch, max_err={max_err}"

    print("KERNEL_OK")
</pallas_src>

<mosaic_0001>
module attributes {stable_mosaic.version = 11 : i64} {
  func.func @mlp_kernel(%arg0: i32, %arg1: memref<2x675xbf16, #tpu.memory_space<vmem>>, %arg2: memref<675x512xbf16, #tpu.memory_space<vmem>>, %arg3: memref<1x512xf32, #tpu.memory_space<vmem>>, %arg4: memref<512x128xbf16, #tpu.memory_space<vmem>>, %arg5: memref<1x128xf32, #tpu.memory_space<vmem>>, %arg6: memref<128x32xbf16, #tpu.memory_space<vmem>>, %arg7: memref<1x32xf32, #tpu.memory_space<vmem>>, %arg8: memref<32x5xbf16, #tpu.memory_space<vmem>>, %arg9: memref<1x5xf32, #tpu.memory_space<vmem>>, %arg10: memref<2x5xf32, #tpu.memory_space<vmem>>) attributes {dimension_semantics = [#tpu.dimension_semantics<parallel>], iteration_bounds = array<i64: 1>, scalar_prefetch = 0 : i64, scratch_operands = 0 : i64, tpu.core_type = #tpu.core_type<tc>, window_params = [{transform_indices = @transform_0, window_bounds = array<i64: 2, 675>}, {pipeline_mode = #tpu.pipeline_mode<synchronous>, transform_indices = @transform_1, window_bounds = array<i64: 675, 512>}, {pipeline_mode = #tpu.pipeline_mode<synchronous>, transform_indices = @transform_2, window_bounds = array<i64: 1, 512>}, {pipeline_mode = #tpu.pipeline_mode<synchronous>, transform_indices = @transform_3, window_bounds = array<i64: 512, 128>}, {pipeline_mode = #tpu.pipeline_mode<synchronous>, transform_indices = @transform_4, window_bounds = array<i64: 1, 128>}, {pipeline_mode = #tpu.pipeline_mode<synchronous>, transform_indices = @transform_5, window_bounds = array<i64: 128, 32>}, {pipeline_mode = #tpu.pipeline_mode<synchronous>, transform_indices = @transform_6, window_bounds = array<i64: 1, 32>}, {pipeline_mode = #tpu.pipeline_mode<synchronous>, transform_indices = @transform_7, window_bounds = array<i64: 32, 5>}, {pipeline_mode = #tpu.pipeline_mode<synchronous>, transform_indices = @transform_8, window_bounds = array<i64: 1, 5>}, {transform_indices = @transform_9, window_bounds = array<i64: 2, 5>}]} {
    %c0 = arith.constant 0 : index
    %c0_0 = arith.constant 0 : index
    %0 = vector.load %arg1[%c0, %c0_0] : memref<2x675xbf16, #tpu.memory_space<vmem>>, vector<2x675xbf16>
    %c0_1 = arith.constant 0 : index
    %c0_2 = arith.constant 0 : index
    %1 = vector.load %arg2[%c0_1, %c0_2] : memref<675x512xbf16, #tpu.memory_space<vmem>>, vector<675x512xbf16>
    %cst = arith.constant dense<0.000000e+00> : vector<2x512xf32>
    %2 = tpu.matmul %0, %1, %cst {dimension_numbers = #tpu.dot_dimension_numbers<[1], [0], [0], [1], [0, 0, 1, 1], [], []>} : vector<2x675xbf16>, vector<675x512xbf16>, vector<2x512xf32> -> vector<2x512xf32>
    %c0_3 = arith.constant 0 : index
    %c0_4 = arith.constant 0 : index
    %3 = vector.load %arg3[%c0_3, %c0_4] : memref<1x512xf32, #tpu.memory_space<vmem>>, vector<1x512xf32>
    %4 = vector.broadcast %3 : vector<1x512xf32> to vector<2x512xf32>
    %5 = arith.addf %2, %4 : vector<2x512xf32>
    %cst_5 = arith.constant 0.000000e+00 : f32
    %6 = vector.broadcast %cst_5 : f32 to vector<2x512xf32>
    %7 = arith.maximumf %5, %6 : vector<2x512xf32>
    %8 = arith.truncf %7 : vector<2x512xf32> to vector<2x512xbf16>
    %c0_6 = arith.constant 0 : index
    %c0_7 = arith.constant 0 : index
    %9 = vector.load %arg4[%c0_6, %c0_7] : memref<512x128xbf16, #tpu.memory_space<vmem>>, vector<512x128xbf16>
    %cst_8 = arith.constant dense<0.000000e+00> : vector<2x128xf32>
    %10 = tpu.matmul %8, %9, %cst_8 {dimension_numbers = #tpu.dot_dimension_numbers<[1], [0], [0], [1], [0, 0, 1, 1], [], []>} : vector<2x512xbf16>, vector<512x128xbf16>, vector<2x128xf32> -> vector<2x128xf32>
    %c0_9 = arith.constant 0 : index
    %c0_10 = arith.constant 0 : index
    %11 = vector.load %arg5[%c0_9, %c0_10] : memref<1x128xf32, #tpu.memory_space<vmem>>, vector<1x128xf32>
    %12 = vector.broadcast %11 : vector<1x128xf32> to vector<2x128xf32>
    %13 = arith.addf %10, %12 : vector<2x128xf32>
    %cst_11 = arith.constant 0.000000e+00 : f32
    %14 = vector.broadcast %cst_11 : f32 to vector<2x128xf32>
    %15 = arith.maximumf %13, %14 : vector<2x128xf32>
    %16 = arith.truncf %15 : vector<2x128xf32> to vector<2x128xbf16>
    %c0_12 = arith.constant 0 : index
    %c0_13 = arith.constant 0 : index
    %17 = vector.load %arg6[%c0_12, %c0_13] : memref<128x32xbf16, #tpu.memory_space<vmem>>, vector<128x32xbf16>
    %cst_14 = arith.constant dense<0.000000e+00> : vector<2x32xf32>
    %18 = tpu.matmul %16, %17, %cst_14 {dimension_numbers = #tpu.dot_dimension_numbers<[1], [0], [0], [1], [0, 0, 1, 1], [], []>} : vector<2x128xbf16>, vector<128x32xbf16>, vector<2x32xf32> -> vector<2x32xf32>
    %c0_15 = arith.constant 0 : index
    %c0_16 = arith.constant 0 : index
    %19 = vector.load %arg7[%c0_15, %c0_16] : memref<1x32xf32, #tpu.memory_space<vmem>>, vector<1x32xf32>
    %20 = vector.broadcast %19 : vector<1x32xf32> to vector<2x32xf32>
    %21 = arith.addf %18, %20 : vector<2x32xf32>
    %cst_17 = arith.constant 0.000000e+00 : f32
    %22 = vector.broadcast %cst_17 : f32 to vector<2x32xf32>
    %23 = arith.maximumf %21, %22 : vector<2x32xf32>
    %24 = arith.truncf %23 : vector<2x32xf32> to vector<2x32xbf16>
    %c0_18 = arith.constant 0 : index
    %c0_19 = arith.constant 0 : index
    %25 = vector.load %arg8[%c0_18, %c0_19] : memref<32x5xbf16, #tpu.memory_space<vmem>>, vector<32x5xbf16>
    %cst_20 = arith.constant dense<0.000000e+00> : vector<2x5xf32>
    %26 = tpu.matmul %24, %25, %cst_20 {dimension_numbers = #tpu.dot_dimension_numbers<[1], [0], [0], [1], [0, 0, 1, 1], [], []>} : vector<2x32xbf16>, vector<32x5xbf16>, vector<2x5xf32> -> vector<2x5xf32>
    %c0_21 = arith.constant 0 : index
    %c0_22 = arith.constant 0 : index
    %27 = vector.load %arg9[%c0_21, %c0_22] : memref<1x5xf32, #tpu.memory_space<vmem>>, vector<1x5xf32>
    %28 = vector.broadcast %27 : vector<1x5xf32> to vector<2x5xf32>
    %29 = arith.addf %26, %28 : vector<2x5xf32>
    %c0_23 = arith.constant 0 : index
    %c0_24 = arith.constant 0 : index
    %30 = vector.load %arg10[%c0_23, %c0_24] : memref<2x5xf32, #tpu.memory_space<vmem>>, vector<2x5xf32>
    tpu.vector_store %arg10[%c0_23, %c0_24], %29 {strides = array<i32>} : memref<2x5xf32, #tpu.memory_space<vmem>>, vector<2x5xf32>,
    return
  }
  func.func @transform_0(%arg0: i32) -> (i32, i32) {
    %c0_i32 = arith.constant 0 : i32
    %c0_i32_0 = arith.constant 0 : i32
    return %arg0, %c0_i32 : i32, i32
  }
  func.func @transform_1(%arg0: i32) -> (i32, i32) {
    %c0_i32 = arith.constant 0 : i32
    %c0_i32_0 = arith.constant 0 : i32
    %c0_i32_1 = arith.constant 0 : i32
    return %c0_i32, %c0_i32_0 : i32, i32
  }
  func.func @transform_2(%arg0: i32) -> (i32, i32) {
    %c0_i32 = arith.constant 0 : i32
    %c0_i32_0 = arith.constant 0 : i32
    %c0_i32_1 = arith.constant 0 : i32
    return %c0_i32, %c0_i32_0 : i32, i32
  }
  func.func @transform_3(%arg0: i32) -> (i32, i32) {
    %c0_i32 = arith.constant 0 : i32
    %c0_i32_0 = arith.constant 0 : i32
    %c0_i32_1 = arith.constant 0 : i32
    return %c0_i32, %c0_i32_0 : i32, i32
  }
  func.func @transform_4(%arg0: i32) -> (i32, i32) {
    %c0_i32 = arith.constant 0 : i32
    %c0_i32_0 = arith.constant 0 : i32
    %c0_i32_1 = arith.constant 0 : i32
    return %c0_i32, %c0_i32_0 : i32, i32
  }
  func.func @transform_5(%arg0: i32) -> (i32, i32) {
    %c0_i32 = arith.constant 0 : i32
    %c0_i32_0 = arith.constant 0 : i32
    %c0_i32_1 = arith.constant 0 : i32
    return %c0_i32, %c0_i32_0 : i32, i32
  }
  func.func @transform_6(%arg0: i32) -> (i32, i32) {
    %c0_i32 = arith.constant 0 : i32
    %c0_i32_0 = arith.constant 0 : i32
    %c0_i32_1 = arith.constant 0 : i32
    return %c0_i32, %c0_i32_0 : i32, i32
  }
  func.func @transform_7(%arg0: i32) -> (i32, i32) {
    %c0_i32 = arith.constant 0 : i32
    %c0_i32_0 = arith.constant 0 : i32
    %c0_i32_1 = arith.constant 0 : i32
    return %c0_i32, %c0_i32_0 : i32, i32
  }
  func.func @transform_8(%arg0: i32) -> (i32, i32) {
    %c0_i32 = arith.constant 0 : i32
    %c0_i32_0 = arith.constant 0 : i32
    %c0_i32_1 = arith.constant 0 : i32
    return %c0_i32, %c0_i32_0 : i32, i32
  }
  func.func @transform_9(%arg0: i32) -> (i32, i32) {
    %c0_i32 = arith.constant 0 : i32
    %c0_i32_0 = arith.constant 0 : i32
    return %arg0, %c0_i32 : i32, i32
  }
}

</mosaic_0001>

<llo_original>
// kernel: mlp_forward.1
$region0: #{mlp_forward.1}
  #allocation0 [shape = 'u32[]', space=smem, size = 0x4, offset = 0x4, fixed_abs, tag = 'smem constant byte address 0x4 - core index']
  #allocation1 [shape = 'u32[144,128]{1,0:T(1,128)}', space=vmem, size = 0x12000, scoped, tag = 'internal scratch']
  %s0 = inlined_call_operand.vmem [shape: bf16[2,675], index: 0, kind: input, shape index: {}]
  %s1 = inlined_call_operand.hbm [shape: bf16[675,512], index: 1, kind: input, shape index: {}]
  %s2 = inlined_call_operand.vmem [shape: f32[1,512], index: 2, kind: input, shape index: {}]
  %s3 = inlined_call_operand.vmem [shape: bf16[512,128], index: 3, kind: input, shape index: {}]
  %s4 = inlined_call_operand.vmem [shape: f32[1,128], index: 4, kind: input, shape index: {}]
  %s5 = inlined_call_operand.vmem [shape: bf16[128,32], index: 5, kind: input, shape index: {}]
  %s6 = inlined_call_operand.vmem [shape: f32[1,32], index: 6, kind: input, shape index: {}]
  %s7 = inlined_call_operand.vmem [shape: bf16[32,5], index: 7, kind: input, shape index: {}]
  %s8 = inlined_call_operand.vmem [shape: f32[1,5], index: 8, kind: input, shape index: {}]
  %s9 = inlined_call_operand.hbm [shape: f32[2,5], index: 9, kind: output, shape index: {}]
  %s10 = sld [smem:[#allocation0]]
  $region50: #{mlp_forward.1} parent=0
    _
  %s12 = ssub.s32 1, %s10
  %s13 = scalar_select 0, %s12, %s10
  $region1: #{mlp_forward.1} parent=0
    #allocation2 [shape = 'u8[696320]{0}', space=vmem, size = 0xaa000, scoped, tag = 'input window, operand 1, single buffered']
    #allocation3 [shape = 's32[1]{0}', space=sflag, size = 0x4, scoped, tag = 'scoped memory for mlp_forward.1']
    #allocation4 [shape = 's32[1]{0}', space=sflag, size = 0x4, scoped, tag = 'scoped memory for mlp_forward.1']
    #allocation5 [shape = 'u8[1024]{0}', space=vmem, size = 0x400, scoped, tag = 'output window, operand 0, single buffered']
    %14 = vsyncpa [#allocation3], 0
    %15 = vsyncpa [#allocation4], 0
    // Predicated region
    $region2: #{mlp_forward.1} parent=1 // pred_check
      _
    $region3: #{mlp_forward.1} parent=1 // pred_check_branch
      %17 = sbr.rel (0) target = $region5
    $region4: #{mlp_forward.1} parent=1 // pred_region
      _
    $region5: #{mlp_forward.1} parent=1 // pred_fallthru
      _
    // Predicated region
    $region6: #{mlp_forward.1} parent=1 // pred_check
      _
    $region7: #{mlp_forward.1} parent=1 // pred_check_branch
      %19 = sbr.rel (0) target = $region9
    $region8: #{mlp_forward.1} parent=1 // pred_region
      %s21 = ssub.s32 21760, 21760
      %22 = vsyncadd [#allocation3], %s21
      %s23 = sshll.u32 [#allocation2], 4
      %s24 = int_to_ptr.vmem [resolvable:$true] %s23
      %29 = dma.hbm_to_vmem [thread:$0]  %s1, 21760, %s24, [#allocation3], 256, 256, 16
    $region9: #{mlp_forward.1} parent=1 // pred_fallthru
      _
    // Predicated region
    $region10: #{mlp_forward.1} parent=1 // pred_check
      _
    $region11: #{mlp_forward.1} parent=1 // pred_check_branch
      %31 = sbr.rel (0) target = $region13
    $region12: #{mlp_forward.1} parent=1 // pred_region
      _
    $region13: #{mlp_forward.1} parent=1 // pred_fallthru
      _
    // Predicated region
    $region14: #{mlp_forward.1} parent=1 // pred_check
      _
    $region15: #{mlp_forward.1} parent=1 // pred_check_branch
      %33 = sbr.rel (0) target = $region17
    $region16: #{mlp_forward.1} parent=1 // pred_region
      _
    $region17: #{mlp_forward.1} parent=1 // pred_fallthru
      _
    // Predicated region
    $region18: #{mlp_forward.1} parent=1 // pred_check
      _
    $region19: #{mlp_forward.1} parent=1 // pred_check_branch
      %35 = sbr.rel (0) target = $region21
    $region20: #{mlp_forward.1} parent=1 // pred_region
      _
    $region21: #{mlp_forward.1} parent=1 // pred_fallthru
      _
    // Predicated region
    $region22: #{mlp_forward.1} parent=1 // pred_check
      _
    $region23: #{mlp_forward.1} parent=1 // pred_check_branch
      %37 = sbr.rel (0) target = $region25
    $region24: #{mlp_forward.1} parent=1 // pred_region
      _
    $region25: #{mlp_forward.1} parent=1 // pred_fallthru
      _
    // Predicated region
    $region26: #{mlp_forward.1} parent=1 // pred_check
      _
    $region27: #{mlp_forward.1} parent=1 // pred_check_branch
      %39 = sbr.rel (0) target = $region29
    $region28: #{mlp_forward.1} parent=1 // pred_region
      _
    $region29: #{mlp_forward.1} parent=1 // pred_fallthru
      _
    // Predicated region
    $region30: #{mlp_forward.1} parent=1 // pred_check
      _
    $region31: #{mlp_forward.1} parent=1 // pred_check_branch
      %41 = sbr.rel (0) target = $region33
    $region32: #{mlp_forward.1} parent=1 // pred_region
      _
    $region33: #{mlp_forward.1} parent=1 // pred_fallthru
      _
    // Predicated region
    $region34: #{mlp_forward.1} parent=1 // pred_check
      _
    $region35: #{mlp_forward.1} parent=1 // pred_check_branch
      %43 = sbr.rel (0) target = $region37
    $region36: #{mlp_forward.1} parent=1 // pred_region
      _
    $region37: #{mlp_forward.1} parent=1 // pred_fallthru
      _
    // Predicated region
    $region38: #{mlp_forward.1} parent=1 // pred_check
      _
    $region39: #{mlp_forward.1} parent=1 // pred_check_branch
      %45 = sbr.rel (0) target = $region41
    $region40: #{mlp_forward.1} parent=1 // pred_region
      %46 = dma.done [#allocation3], 21760
    $region41: #{mlp_forward.1} parent=1 // pred_fallthru
      _
    %v48 = vld [vmem:[%s0] sm:$0x3f]
    %v49 = vld [vmem:[#allocation2] sm:$0xff]
    %v50 = vld [vmem:[#allocation2 + $0x8] sm:$0xff]
    %v51 = vld [vmem:[#allocation2 + $0x10] sm:$0xff]
    %v52 = vld [vmem:[#allocation2 + $0x18] sm:$0xff]
    %v53 = vld [vmem:[#allocation2 + $0x20] sm:$0xff]
    %v54 = vld [vmem:[#allocation2 + $0x28] sm:$0xff]
    %v55 = vld [vmem:[#allocation2 + $0x30] sm:$0xff]
    %v56 = vld [vmem:[#allocation2 + $0x38] sm:$0xff]
    %v57 = vld [vmem:[#allocation2 + $0x40] sm:$0xff]
    %v58 = vld [vmem:[#allocation2 + $0x48] sm:$0xff]
    %v59 = vld [vmem:[#allocation2 + $0x50] sm:$0xff]
    %v60 = vld [vmem:[#allocation2 + $0x58] sm:$0xff]
    %v61 = vld [vmem:[#allocation2 + $0x60] sm:$0xff]
    %v62 = vld [vmem:[#allocation2 + $0x68] sm:$0xff]
    %v63 = vld [vmem:[#allocation2 + $0x70] sm:$0xff]
    %v64 = vld [vmem:[#allocation2 + $0x78] sm:$0xff]
    %v65 = vld [vmem:[#allocation2 + $0x80] sm:$0xff]
    %v66 = vld [vmem:[#allocation2 + $0x88] sm:$0xff]
    %v67 = vld [vmem:[#allocation2 + $0x90] sm:$0xff]
    %v68 = vld [vmem:[#allocation2 + $0x98] sm:$0xff]
    %v69 = vld [vmem:[#allocation2 + $0xa0] sm:$0xff]
    %v70 = vld [vmem:[#allocation2 + $0xa8] sm:$0xff]
    %v71 = vld [vmem:[#allocation2 + $0xb0] sm:$0xff]
    %v72 = vld [vmem:[#allocation2 + $0xb8] sm:$0xff]
    %v73 = vld [vmem:[#allocation2 + $0xc0] sm:$0xff]
    %v74 = vld [vmem:[#allocation2 + $0xc8] sm:$0xff]
    %v75 = vld [vmem:[#allocation2 + $0xd0] sm:$0xff]
    %v76 = vld [vmem:[#allocation2 + $0xd8] sm:$0xff]
    %v77 = vld [vmem:[#allocation2 + $0xe0] sm:$0xff]
    %v78 = vld [vmem:[#allocation2 + $0xe8] sm:$0xff]
    %v79 = vld [vmem:[#allocation2 + $0xf0] sm:$0xff]
    %v80 = vld [vmem:[#allocation2 + $0xf8] sm:$0xff]
    %v81 = vld [vmem:[#allocation2 + $0x100] sm:$0xff]
    %v82 = vld [vmem:[#allocation2 + $0x108] sm:$0xff]
    %v83 = vld [vmem:[#allocation2 + $0x110] sm:$0xff]
    %v84 = vld [vmem:[#allocation2 + $0x118] sm:$0xff]
    %v85 = vld [vmem:[#allocation2 + $0x120] sm:$0xff]
    %v86 = vld [vmem:[#allocation2 + $0x128] sm:$0xff]
    %v87 = vld [vmem:[#allocation2 + $0x130] sm:$0xff]
    %v88 = vld [vmem:[#allocation2 + $0x138] sm:$0xff]
    %v89 = vld [vmem:[#allocation2 + $0x140] sm:$0xff]
    %v90 = vld [vmem:[#allocation2 + $0x148] sm:$0xff]
    %v91 = vld [vmem:[#allocation2 + $0x150] sm:$0xff]
    %v92 = vld [vmem:[#allocation2 + $0x158] sm:$0xff]
    %v93 = vld [vmem:[#allocation2 + $0x160] sm:$0xff]
    %v94 = vld [vmem:[#allocation2 + $0x168] sm:$0xff]
    %v95 = vld [vmem:[#allocation2 + $0x170] sm:$0xff]
    %v96 = vld [vmem:[#allocation2 + $0x178] sm:$0xff]
    %v97 = vld [vmem:[#allocation2 + $0x180] sm:$0xff]
    %v98 = vld [vmem:[#allocation2 + $0x188] sm:$0xff]
    %v99 = vld [vmem:[#allocation2 + $0x190] sm:$0xff]
    %v100 = vld [vmem:[#allocation2 + $0x198] sm:$0xff]
    %v101 = vld [vmem:[#allocation2 + $0x1a0] sm:$0xff]
    %v102 = vld [vmem:[#allocation2 + $0x1a8] sm:$0xff]
    %v103 = vld [vmem:[#allocation2 + $0x1b0] sm:$0xff]
    %v104 = vld [vmem:[#allocation2 + $0x1b8] sm:$0xff]
    %v105 = vld [vmem:[#allocation2 + $0x1c0] sm:$0xff]
    %v106 = vld [vmem:[#allocation2 + $0x1c8] sm:$0xff]
    %v107 = vld [vmem:[#allocation2 + $0x1d0] sm:$0xff]
    %v108 = vld [vmem:[#allocation2 + $0x1d8] sm:$0xff]
    %v109 = vld [vmem:[#allocation2 + $0x1e0] sm:$0xff]
    %v110 = vld [vmem:[#allocation2 + $0x1e8] sm:$0xff]
    %v111 = vld [vmem:[#allocation2 + $0x1f0] sm:$0xff]
    %v112 = vld [vmem:[#allocation2 + $0x1f8] sm:$0xff]
    %v113 = vld [vmem:[#allocation2 + $0x200] sm:$0xff]
    %v114 = vld [vmem:[#allocation2 + $0x208] sm:$0xff]
    %v115 = vld [vmem:[#allocation2 + $0x210] sm:$0xff]
    %v116 = vld [vmem:[#allocation2 + $0x218] sm:$0xff]
    %v117 = vld [vmem:[#allocation2 + $0x220] sm:$0xff]
    %v118 = vld [vmem:[#allocation2 + $0x228] sm:$0xff]
    %v119 = vld [vmem:[#allocation2 + $0x230] sm:$0xff]
    %v120 = vld [vmem:[#allocation2 + $0x238] sm:$0xff]
    %v121 = vld [vmem:[#allocation2 + $0x240] sm:$0xff]
    %v122 = vld [vmem:[#allocation2 + $0x248] sm:$0xff]
    %v123 = vld [vmem:[#allocation2 + $0x250] sm:$0xff]
    %v124 = vld [vmem:[#allocation2 + $0x258] sm:$0xff]
    %v125 = vld [vmem:[#allocation2 + $0x260] sm:$0xff]
    %v126 = vld [vmem:[#allocation2 + $0x268] sm:$0xff]
    %v127 = vld [vmem:[#allocation2 + $0x270] sm:$0xff]
    %v128 = vld [vmem:[#allocation2 + $0x278] sm:$0xff]
    %v129 = vld [vmem:[#allocation2 + $0x280] sm:$0xff]
    %v130 = vld [vmem:[#allocation2 + $0x288] sm:$0xff]
    %v131 = vld [vmem:[#allocation2 + $0x290] sm:$0xff]
    %v132 = vld [vmem:[#allocation2 + $0x298] sm:$0xff]
    %v133 = vld [vmem:[#allocation2 + $0x2a0] sm:$0xff]
    %v134 = vld [vmem:[#allocation2 + $0x2a8] sm:$0xff]
    %v135 = vld [vmem:[#allocation2 + $0x2b0] sm:$0xff]
    %v136 = vld [vmem:[#allocation2 + $0x2b8] sm:$0xff]
    %v137 = vld [vmem:[#allocation2 + $0x2c0] sm:$0xff]
    %v138 = vld [vmem:[#allocation2 + $0x2c8] sm:$0xff]
    %v139 = vld [vmem:[#allocation2 + $0x2d0] sm:$0xff]
    %v140 = vld [vmem:[#allocation2 + $0x2d8] sm:$0xff]
    %v141 = vld [vmem:[#allocation2 + $0x2e0] sm:$0xff]
    %v142 = vld [vmem:[#allocation2 + $0x2e8] sm:$0xff]
    %v143 = vld [vmem:[#allocation2 + $0x2f0] sm:$0xff]
    %v144 = vld [vmem:[#allocation2 + $0x2f8] sm:$0xff]
    %v145 = vld [vmem:[#allocation2 + $0x300] sm:$0xff]
    %v146 = vld [vmem:[#allocation2 + $0x308] sm:$0xff]
    %v147 = vld [vmem:[#allocation2 + $0x310] sm:$0xff]
    %v148 = vld [vmem:[#allocation2 + $0x318] sm:$0xff]
    %v149 = vld [vmem:[#allocation2 + $0x320] sm:$0xff]
    %v150 = vld [vmem:[#allocation2 + $0x328] sm:$0xff]
    %v151 = vld [vmem:[#allocation2 + $0x330] sm:$0xff]
    %v152 = vld [vmem:[#allocation2 + $0x338] sm:$0xff]
    %v153 = vld [vmem:[#allocation2 + $0x340] sm:$0xff]
    %v154 = vld [vmem:[#allocation2 + $0x348] sm:$0xff]
    %v155 = vld [vmem:[#allocation2 + $0x350] sm:$0xff]
    %v156 = vld [vmem:[#allocation2 + $0x358] sm:$0xff]
    %v157 = vld [vmem:[#allocation2 + $0x360] sm:$0xff]
    %v158 = vld [vmem:[#allocation2 + $0x368] sm:$0xff]
    %v159 = vld [vmem:[#allocation2 + $0x370] sm:$0xff]
    %v160 = vld [vmem:[#allocation2 + $0x378] sm:$0xff]
    %v161 = vld [vmem:[#allocation2 + $0x380] sm:$0xff]
    %v162 = vld [vmem:[#allocation2 + $0x388] sm:$0xff]
    %v163 = vld [vmem:[#allocation2 + $0x390] sm:$0xff]
    %v164 = vld [vmem:[#allocation2 + $0x398] sm:$0xff]
    %v165 = vld [vmem:[#allocation2 + $0x3a0] sm:$0xff]
    %v166 = vld [vmem:[#allocation2 + $0x3a8] sm:$0xff]
    %v167 = vld [vmem:[#allocation2 + $0x3b0] sm:$0xff]
    %v168 = vld [vmem:[#allocation2 + $0x3b8] sm:$0xff]
    %v169 = vld [vmem:[#allocation2 + $0x3c0] sm:$0xff]
    %v170 = vld [vmem:[#allocation2 + $0x3c8] sm:$0xff]
    %v171 = vld [vmem:[#allocation2 + $0x3d0] sm:$0xff]
    %v172 = vld [vmem:[#allocation2 + $0x3d8] sm:$0xff]
    %v173 = vld [vmem:[#allocation2 + $0x3e0] sm:$0xff]
    %v174 = vld [vmem:[#allocation2 + $0x3e8] sm:$0xff]
    %v175 = vld [vmem:[#allocation2 + $0x3f0] sm:$0xff]
    %v176 = vld [vmem:[#allocation2 + $0x3f8] sm:$0xff]
    %v177 = vld [vmem:[#allocation2 + $0x400] sm:$0xff]
    %v178 = vld [vmem:[#allocation2 + $0x408] sm:$0xff]
    %v179 = vld [vmem:[#allocation2 + $0x410] sm:$0xff]
    %v180 = vld [vmem:[#allocation2 + $0x418] sm:$0xff]
    %v181 = vld [vmem:[#allocation2 + $0x420] sm:$0xff]
    %v182 = vld [vmem:[#allocation2 + $0x428] sm:$0xff]
    %v183 = vld [vmem:[#allocation2 + $0x430] sm:$0xff]
    %v184 = vld [vmem:[#allocation2 + $0x438] sm:$0xff]
    %v185 = vld [vmem:[#allocation2 + $0x440] sm:$0xff]
    %v186 = vld [vmem:[#allocation2 + $0x448] sm:$0xff]
    %v187 = vld [vmem:[#allocation2 + $0x450] sm:$0xff]
    %v188 = vld [vmem:[#allocation2 + $0x458] sm:$0xff]
    %v189 = vld [vmem:[#allocation2 + $0x460] sm:$0xff]
    %v190 = vld [vmem:[#allocation2 + $0x468] sm:$0xff]
    %v191 = vld [vmem:[#allocation2 + $0x470] sm:$0xff]
    %v192 = vld [vmem:[#allocation2 + $0x478] sm:$0xff]
    %v193 = vld [vmem:[#allocation2 + $0x480] sm:$0xff]
    %v194 = vld [vmem:[#allocation2 + $0x488] sm:$0xff]
    %v195 = vld [vmem:[#allocation2 + $0x490] sm:$0xff]
    %v196 = vld [vmem:[#allocation2 + $0x498] sm:$0xff]
    %v197 = vld [vmem:[#allocation2 + $0x4a0] sm:$0xff]
    %v198 = vld [vmem:[#allocation2 + $0x4a8] sm:$0xff]
    %v199 = vld [vmem:[#allocation2 + $0x4b0] sm:$0xff]
    %v200 = vld [vmem:[#allocation2 + $0x4b8] sm:$0xff]
    %v201 = vld [vmem:[#allocation2 + $0x4c0] sm:$0xff]
    %v202 = vld [vmem:[#allocation2 + $0x4c8] sm:$0xff]
    %v203 = vld [vmem:[#allocation2 + $0x4d0] sm:$0xff]
    %v204 = vld [vmem:[#allocation2 + $0x4d8] sm:$0xff]
    %v205 = vld [vmem:[#allocation2 + $0x4e0] sm:$0xff]
    %v206 = vld [vmem:[#allocation2 + $0x4e8] sm:$0xff]
    %v207 = vld [vmem:[#allocation2 + $0x4f0] sm:$0xff]
    %v208 = vld [vmem:[#allocation2 + $0x4f8] sm:$0xff]
    %v209 = vld [vmem:[#allocation2 + $0x500] sm:$0xff]
    %v210 = vld [vmem:[#allocation2 + $0x508] sm:$0xff]
    %v211 = vld [vmem:[#allocation2 + $0x510] sm:$0xff]
    %v212 = vld [vmem:[#allocation2 + $0x518] sm:$0xff]
    %v213 = vld [vmem:[#allocation2 + $0x520] sm:$0xff]
    %v214 = vld [vmem:[#allocation2 + $0x528] sm:$0xff]
    %v215 = vld [vmem:[#allocation2 + $0x530] sm:$0xff]
    %v216 = vld [vmem:[#allocation2 + $0x538] sm:$0xff]
    %v217 = vld [vmem:[#allocation2 + $0x540] sm:$0x33]
    %v218 = vld [vmem:[#allocation2 + $0x548] sm:$0x33]
    %v219 = vld [vmem:[%s2] sm:$0xf]
    %v221 = vlaneseq
    %v222 = vshrl.u32 %v221, 7
    %v223 = vsub.s32 0, %v222
    %v224 = vrot.slane %v219, %v223
    %v225 = vlaneseq
    %v226 = vshrl.u32 %v225, 7
    %v227 = vsub.s32 1, %v226
    %v228 = vrot.slane %v219, %v227
    %v229 = vlaneseq
    %v230 = vshrl.u32 %v229, 7
    %v231 = vsub.s32 2, %v230
    %v232 = vrot.slane %v219, %v231
    %v233 = vlaneseq
    %v234 = vshrl.u32 %v233, 7
    %v235 = vsub.s32 3, %v234
    %v236 = vrot.slane %v219, %v235
    %v242 = vcombine.high %v48, %v48
    %v244 = vunpack.c.l.s4 1966171168
    %v245 = vunpack.c.0.s8 %v244
    %v246 = vlaneseq
    %v247 = vshrl.u32 %v246, 7
    %v248 = vsub.s32 %v245, %v247
    %v249 = vrot.slane %v48, %v248
    %v251 = vunpack.c.l.s4 1966171168
    %v252 = vunpack.c.0.s8 %v251
    %v253 = vlaneseq
    %v254 = vshrl.u32 %v253, 7
    %v255 = vsub.s32 %v252, %v254
    %v256 = vrot.slane %v242, %v255
    %v257 = vcombine.high %v249, %v249
    %v258 = vcombine.high %v256, %v256
    %v260 = vunpack.c.l.s4 1966171168
    %v261 = vunpack.c.0.s8 %v260
    %v262 = vlaneseq
    %v263 = vshrl.u32 %v262, 7
    %v264 = vsub.s32 %v261, %v263
    %v265 = vrot.slane %v249, %v264
    %v267 = vunpack.c.l.s4 1966171168
    %v268 = vunpack.c.0.s8 %v267
    %v269 = vlaneseq
    %v270 = vshrl.u32 %v269, 7
    %v271 = vsub.s32 %v268, %v270
    %v272 = vrot.slane %v256, %v271
    %v274 = vunpack.c.l.s4 1966171168
    %v275 = vunpack.c.0.s8 %v274
    %v276 = vlaneseq
    %v277 = vshrl.u32 %v276, 7
    %v278 = vsub.s32 %v275, %v277
    %v279 = vrot.slane %v257, %v278
    %v281 = vunpack.c.l.s4 1966171168
    %v282 = vunpack.c.0.s8 %v281
    %v283 = vlaneseq
    %v284 = vshrl.u32 %v283, 7
    %v285 = vsub.s32 %v282, %v284
    %v286 = vrot.slane %v258, %v285
    %v287 = vcombine.high %v265, %v265
    %v288 = vcombine.high %v279, %v279
    %v464 = vunpack.c.l.b16 %v49
    %v465 = vunpack.c.h.b16 %v49
    %v466 = vunpack.c.l.b16 %v50
    %v467 = vunpack.c.h.b16 %v50
    %v468 = vunpack.c.l.b16 %v51
    %v469 = vunpack.c.h.b16 %v51
    %v470 = vunpack.c.l.b16 %v52
    %v471 = vunpack.c.h.b16 %v52
    %v472 = vunpack.c.l.b16 %v53
    %v473 = vunpack.c.h.b16 %v53
    %v474 = vunpack.c.l.b16 %v54
    %v475 = vunpack.c.h.b16 %v54
    %v476 = vunpack.c.l.b16 %v55
    %v477 = vunpack.c.h.b16 %v55
    %v478 = vunpack.c.l.b16 %v56
    %v479 = vunpack.c.h.b16 %v56
    %v480 = vunpack.c.l.b16 %v57
    %v481 = vunpack.c.h.b16 %v57
    %v482 = vunpack.c.l.b16 %v58
    %v483 = vunpack.c.h.b16 %v58
    %v484 = vunpack.c.l.b16 %v59
    %v485 = vunpack.c.h.b16 %v59
    %v486 = vunpack.c.l.b16 %v60
    %v487 = vunpack.c.h.b16 %v60
    %v488 = vunpack.c.l.b16 %v61
    %v489 = vunpack.c.h.b16 %v61
    %v490 = vunpack.c.l.b16 %v62
    %v491 = vunpack.c.h.b16 %v62
    %v492 = vunpack.c.l.b16 %v63
    %v493 = vunpack.c.h.b16 %v63
    %v494 = vunpack.c.l.b16 %v64
    %v495 = vunpack.c.h.b16 %v64
    %v496 = vunpack.c.l.b16 %v65
    %v497 = vunpack.c.h.b16 %v65
    %v498 = vunpack.c.l.b16 %v66
    %v499 = vunpack.c.h.b16 %v66
    %v500 = vunpack.c.l.b16 %v67
    %v501 = vunpack.c.h.b16 %v67
    %v502 = vunpack.c.l.b16 %v68
    %v503 = vunpack.c.h.b16 %v68
    %v504 = vunpack.c.l.b16 %v69
    %v505 = vunpack.c.h.b16 %v69
    %v506 = vunpack.c.l.b16 %v70
    %v507 = vunpack.c.h.b16 %v70
    %v508 = vunpack.c.l.b16 %v71
    %v509 = vunpack.c.h.b16 %v71
    %v510 = vunpack.c.l.b16 %v72
    %v511 = vunpack.c.h.b16 %v72
    %v512 = vunpack.c.l.b16 %v73
    %v513 = vunpack.c.h.b16 %v73
    %v514 = vunpack.c.l.b16 %v74
    %v515 = vunpack.c.h.b16 %v74
    %v516 = vunpack.c.l.b16 %v75
    %v517 = vunpack.c.h.b16 %v75
    %v518 = vunpack.c.l.b16 %v76
    %v519 = vunpack.c.h.b16 %v76
    %v520 = vunpack.c.l.b16 %v77
    %v521 = vunpack.c.h.b16 %v77
    %v522 = vunpack.c.l.b16 %v78
    %v523 = vunpack.c.h.b16 %v78
    %v524 = vunpack.c.l.b16 %v79
    %v525 = vunpack.c.h.b16 %v79
    %v526 = vunpack.c.l.b16 %v80
    %v527 = vunpack.c.h.b16 %v80
    %v528 = vunpack.c.l.b16 %v81
    %v529 = vunpack.c.h.b16 %v81
    %v530 = vunpack.c.l.b16 %v82
    %v531 = vunpack.c.h.b16 %v82
    %v532 = vunpack.c.l.b16 %v83
    %v533 = vunpack.c.h.b16 %v83
    %v534 = vunpack.c.l.b16 %v84
    %v535 = vunpack.c.h.b16 %v84
    %v536 = vunpack.c.l.b16 %v85
    %v537 = vunpack.c.h.b16 %v85
    %v538 = vunpack.c.l.b16 %v86
    %v539 = vunpack.c.h.b16 %v86
    %v540 = vunpack.c.l.b16 %v87
    %v541 = vunpack.c.h.b16 %v87
    %v542 = vunpack.c.l.b16 %v88
    %v543 = vunpack.c.h.b16 %v88
    %v544 = vunpack.c.l.b16 %v89
    %v545 = vunpack.c.h.b16 %v89
    %v546 = vunpack.c.l.b16 %v90
    %v547 = vunpack.c.h.b16 %v90
    %v548 = vunpack.c.l.b16 %v91
    %v549 = vunpack.c.h.b16 %v91
    %v550 = vunpack.c.l.b16 %v92
    %v551 = vunpack.c.h.b16 %v92
    %v552 = vunpack.c.l.b16 %v93
    %v553 = vunpack.c.h.b16 %v93
    %v554 = vunpack.c.l.b16 %v94
    %v555 = vunpack.c.h.b16 %v94
    %v556 = vunpack.c.l.b16 %v95
    %v557 = vunpack.c.h.b16 %v95
    %v558 = vunpack.c.l.b16 %v96
    %v559 = vunpack.c.h.b16 %v96
    %v560 = vunpack.c.l.b16 %v97
    %v561 = vunpack.c.h.b16 %v97
    %v562 = vunpack.c.l.b16 %v98
    %v563 = vunpack.c.h.b16 %v98
    %v564 = vunpack.c.l.b16 %v99
    %v565 = vunpack.c.h.b16 %v99
    %v566 = vunpack.c.l.b16 %v100
    %v567 = vunpack.c.h.b16 %v100
    %v568 = vunpack.c.l.b16 %v101
    %v569 = vunpack.c.h.b16 %v101
    %v570 = vunpack.c.l.b16 %v102
    %v571 = vunpack.c.h.b16 %v102
    %v572 = vunpack.c.l.b16 %v103
    %v573 = vunpack.c.h.b16 %v103
    %v574 = vunpack.c.l.b16 %v104
    %v575 = vunpack.c.h.b16 %v104
    %v576 = vunpack.c.l.b16 %v105
    %v577 = vunpack.c.h.b16 %v105
    %v578 = vunpack.c.l.b16 %v106
    %v579 = vunpack.c.h.b16 %v106
    %v580 = vunpack.c.l.b16 %v107
    %v581 = vunpack.c.h.b16 %v107
    %v582 = vunpack.c.l.b16 %v108
    %v583 = vunpack.c.h.b16 %v108
    %v584 = vunpack.c.l.b16 %v109
    %v585 = vunpack.c.h.b16 %v109
    %v586 = vunpack.c.l.b16 %v110
    %v587 = vunpack.c.h.b16 %v110
    %v588 = vunpack.c.l.b16 %v111
    %v589 = vunpack.c.h.b16 %v111
    %v590 = vunpack.c.l.b16 %v112
    %v591 = vunpack.c.h.b16 %v112
    %v592 = vunpack.c.l.b16 %v113
    %v593 = vunpack.c.h.b16 %v113
    %v594 = vunpack.c.l.b16 %v114
    %v595 = vunpack.c.h.b16 %v114
    %v596 = vunpack.c.l.b16 %v115
    %v597 = vunpack.c.h.b16 %v115
    %v598 = vunpack.c.l.b16 %v116
    %v599 = vunpack.c.h.b16 %v116
    %v600 = vunpack.c.l.b16 %v117
    %v601 = vunpack.c.h.b16 %v117
    %v602 = vunpack.c.l.b16 %v118
    %v603 = vunpack.c.h.b16 %v118
    %v604 = vunpack.c.l.b16 %v119
    %v605 = vunpack.c.h.b16 %v119
    %v606 = vunpack.c.l.b16 %v120
    %v607 = vunpack.c.h.b16 %v120
    %v608 = vunpack.c.l.b16 %v121
    %v609 = vunpack.c.h.b16 %v121
    %v610 = vunpack.c.l.b16 %v122
    %v611 = vunpack.c.h.b16 %v122
    %v612 = vunpack.c.l.b16 %v123
    %v613 = vunpack.c.h.b16 %v123
    %v614 = vunpack.c.l.b16 %v124
    %v615 = vunpack.c.h.b16 %v124
    %v616 = vunpack.c.l.b16 %v125
    %v617 = vunpack.c.h.b16 %v125
    %v618 = vunpack.c.l.b16 %v126
    %v619 = vunpack.c.h.b16 %v126
    %v620 = vunpack.c.l.b16 %v127
    %v621 = vunpack.c.h.b16 %v127
    %v622 = vunpack.c.l.b16 %v128
    %v623 = vunpack.c.h.b16 %v128
    %v624 = vunpack.c.l.b16 %v129
    %v625 = vunpack.c.h.b16 %v129
    %v626 = vunpack.c.l.b16 %v130
    %v627 = vunpack.c.h.b16 %v130
    %v628 = vunpack.c.l.b16 %v131
    %v629 = vunpack.c.h.b16 %v131
    %v630 = vunpack.c.l.b16 %v132
    %v631 = vunpack.c.h.b16 %v132
    %v632 = vunpack.c.l.b16 %v133
    %v633 = vunpack.c.h.b16 %v133
    %v634 = vunpack.c.l.b16 %v134
    %v635 = vunpack.c.h.b16 %v134
    %v636 = vunpack.c.l.b16 %v135
    %v637 = vunpack.c.h.b16 %v135
    %v638 = vunpack.c.l.b16 %v136
    %v639 = vunpack.c.h.b16 %v136
    %v640 = vunpack.c.l.b16 %v137
    %v641 = vunpack.c.h.b16 %v137
    %v642 = vunpack.c.l.b16 %v138
    %v643 = vunpack.c.h.b16 %v138
    %v644 = vunpack.c.l.b16 %v139
    %v645 = vunpack.c.h.b16 %v139
    %v646 = vunpack.c.l.b16 %v140
    %v647 = vunpack.c.h.b16 %v140
    %v648 = vunpack.c.l.b16 %v141
    %v649 = vunpack.c.h.b16 %v141
    %v650 = vunpack.c.l.b16 %v142
    %v651 = vunpack.c.h.b16 %v142
    %v652 = vunpack.c.l.b16 %v143
    %v653 = vunpack.c.h.b16 %v143
    %v654 = vunpack.c.l.b16 %v144
    %v655 = vunpack.c.h.b16 %v144
    %v656 = vunpack.c.l.b16 %v145
    %v657 = vunpack.c.h.b16 %v145
    %v658 = vunpack.c.l.b16 %v146
    %v659 = vunpack.c.h.b16 %v146
    %v660 = vunpack.c.l.b16 %v147
    %v661 = vunpack.c.h.b16 %v147
    %v662 = vunpack.c.l.b16 %v148
    %v663 = vunpack.c.h.b16 %v148
    %v664 = vunpack.c.l.b16 %v149
    %v665 = vunpack.c.h.b16 %v149
    %v666 = vunpack.c.l.b16 %v150
    %v667 = vunpack.c.h.b16 %v150
    %v668 = vunpack.c.l.b16 %v151
    %v669 = vunpack.c.h.b16 %v151
    %v670 = vunpack.c.l.b16 %v152
    %v671 = vunpack.c.h.b16 %v152
    %v672 = vunpack.c.l.b16 %v153
    %v673 = vunpack.c.h.b16 %v153
    %v674 = vunpack.c.l.b16 %v154
    %v675 = vunpack.c.h.b16 %v154
    %v676 = vunpack.c.l.b16 %v155
    %v677 = vunpack.c.h.b16 %v155
    %v678 = vunpack.c.l.b16 %v156
    %v679 = vunpack.c.h.b16 %v156
    %v680 = vunpack.c.l.b16 %v157
    %v681 = vunpack.c.h.b16 %v157
    %v682 = vunpack.c.l.b16 %v158
    %v683 = vunpack.c.h.b16 %v158
    %v684 = vunpack.c.l.b16 %v159
    %v685 = vunpack.c.h.b16 %v159
    %v686 = vunpack.c.l.b16 %v160
    %v687 = vunpack.c.h.b16 %v160
    %v688 = vunpack.c.l.b16 %v161
    %v689 = vunpack.c.h.b16 %v161
    %v690 = vunpack.c.l.b16 %v162
    %v691 = vunpack.c.h.b16 %v162
    %v692 = vunpack.c.l.b16 %v163
    %v693 = vunpack.c.h.b16 %v163
    %v694 = vunpack.c.l.b16 %v164
    %v695 = vunpack.c.h.b16 %v164
    %v696 = vunpack.c.l.b16 %v165
    %v697 = vunpack.c.h.b16 %v165
    %v698 = vunpack.c.l.b16 %v166
    %v699 = vunpack.c.h.b16 %v166
    %v700 = vunpack.c.l.b16 %v167
    %v701 = vunpack.c.h.b16 %v167
    %v702 = vunpack.c.l.b16 %v168
    %v703 = vunpack.c.h.b16 %v168
    %v704 = vunpack.c.l.b16 %v169
    %v705 = vunpack.c.h.b16 %v169
    %v706 = vunpack.c.l.b16 %v170
    %v707 = vunpack.c.h.b16 %v170
    %v708 = vunpack.c.l.b16 %v171
    %v709 = vunpack.c.h.b16 %v171
    %v710 = vunpack.c.l.b16 %v172
    %v711 = vunpack.c.h.b16 %v172
    %v712 = vunpack.c.l.b16 %v173
    %v713 = vunpack.c.h.b16 %v173
    %v714 = vunpack.c.l.b16 %v174
    %v715 = vunpack.c.h.b16 %v174
    %v716 = vunpack.c.l.b16 %v175
    %v717 = vunpack.c.h.b16 %v175
    %v718 = vunpack.c.l.b16 %v176
    %v719 = vunpack.c.h.b16 %v176
    %v720 = vunpack.c.l.b16 %v177
    %v721 = vunpack.c.h.b16 %v177
    %v722 = vunpack.c.l.b16 %v178
    %v723 = vunpack.c.h.b16 %v178
    %v724 = vunpack.c.l.b16 %v179
    %v725 = vunpack.c.h.b16 %v179
    %v726 = vunpack.c.l.b16 %v180
    %v727 = vunpack.c.h.b16 %v180
    %v728 = vunpack.c.l.b16 %v181
    %v729 = vunpack.c.h.b16 %v181
    %v730 = vunpack.c.l.b16 %v182
    %v731 = vunpack.c.h.b16 %v182
    %v732 = vunpack.c.l.b16 %v183
    %v733 = vunpack.c.h.b16 %v183
    %v734 = vunpack.c.l.b16 %v184
    %v735 = vunpack.c.h.b16 %v184
    %v736 = vunpack.c.l.b16 %v185
    %v737 = vunpack.c.h.b16 %v185
    %v738 = vunpack.c.l.b16 %v186
    %v739 = vunpack.c.h.b16 %v186
    %v740 = vunpack.c.l.b16 %v187
    %v741 = vunpack.c.h.b16 %v187
    %v742 = vunpack.c.l.b16 %v188
    %v743 = vunpack.c.h.b16 %v188
    %v744 = vunpack.c.l.b16 %v189
    %v745 = vunpack.c.h.b16 %v189
    %v746 = vunpack.c.l.b16 %v190
    %v747 = vunpack.c.h.b16 %v190
    %v748 = vunpack.c.l.b16 %v191
    %v749 = vunpack.c.h.b16 %v191
    %v750 = vunpack.c.l.b16 %v192
    %v751 = vunpack.c.h.b16 %v192
    %v752 = vunpack.c.l.b16 %v193
    %v753 = vunpack.c.h.b16 %v193
    %v754 = vunpack.c.l.b16 %v194
    %v755 = vunpack.c.h.b16 %v194
    %v756 = vunpack.c.l.b16 %v195
    %v757 = vunpack.c.h.b16 %v195
    %v758 = vunpack.c.l.b16 %v196
    %v759 = vunpack.c.h.b16 %v196
    %v760 = vunpack.c.l.b16 %v197
    %v761 = vunpack.c.h.b16 %v197
    %v762 = vunpack.c.l.b16 %v198
    %v763 = vunpack.c.h.b16 %v198
    %v764 = vunpack.c.l.b16 %v199
    %v765 = vunpack.c.h.b16 %v199
    %v766 = vunpack.c.l.b16 %v200
    %v767 = vunpack.c.h.b16 %v200
    %v768 = vunpack.c.l.b16 %v201
    %v769 = vunpack.c.h.b16 %v201
    %v770 = vunpack.c.l.b16 %v202
    %v771 = vunpack.c.h.b16 %v202
    %v772 = vunpack.c.l.b16 %v203
    %v773 = vunpack.c.h.b16 %v203
    %v774 = vunpack.c.l.b16 %v204
    %v775 = vunpack.c.h.b16 %v204
    %v776 = vunpack.c.l.b16 %v205
    %v777 = vunpack.c.h.b16 %v205
    %v778 = vunpack.c.l.b16 %v206
    %v779 = vunpack.c.h.b16 %v206
    %v780 = vunpack.c.l.b16 %v207
    %v781 = vunpack.c.h.b16 %v207
    %v782 = vunpack.c.l.b16 %v208
    %v783 = vunpack.c.h.b16 %v208
    %v784 = vunpack.c.l.b16 %v209
    %v785 = vunpack.c.h.b16 %v209
    %v786 = vunpack.c.l.b16 %v210
    %v787 = vunpack.c.h.b16 %v210
    %v788 = vunpack.c.l.b16 %v211
    %v789 = vunpack.c.h.b16 %v211
    %v790 = vunpack.c.l.b16 %v212
    %v791 = vunpack.c.h.b16 %v212
    %v792 = vunpack.c.l.b16 %v213
    %v793 = vunpack.c.h.b16 %v213
    %v794 = vunpack.c.l.b16 %v214
    %v795 = vunpack.c.h.b16 %v214
    %v796 = vunpack.c.l.b16 %v215
    %v797 = vunpack.c.h.b16 %v215
    %v798 = vunpack.c.l.b16 %v216
    %v799 = vunpack.c.h.b16 %v216
    %v800 = vunpack.c.l.b16 %v217
    %v801 = vunpack.c.h.b16 %v217
    %v802 = vunpack.c.l.b16 %v218
    %v803 = vunpack.c.h.b16 %v218
    %v804 = vpack.c.b16 %v468, %v464
    %v805 = vpack.c.b16 %v469, %v465
    %v806 = vpack.c.b16 %v470, %v466
    %v807 = vpack.c.b16 %v471, %v467
    %v808 = vpack.c.b16 %v476, %v472
    %v809 = vpack.c.b16 %v477, %v473
    %v810 = vpack.c.b16 %v478, %v474
    %v811 = vpack.c.b16 %v479, %v475
    %v812 = vpack.c.b16 %v484, %v480
    %v813 = vpack.c.b16 %v485, %v481
    %v814 = vpack.c.b16 %v486, %v482
    %v815 = vpack.c.b16 %v487, %v483
    %v816 = vpack.c.b16 %v492, %v488
    %v817 = vpack.c.b16 %v493, %v489
    %v818 = vpack.c.b16 %v494, %v490
    %v819 = vpack.c.b16 %v495, %v491
    %v820 = vpack.c.b16 %v500, %v496
    %v821 = vpack.c.b16 %v501, %v497
    %v822 = vpack.c.b16 %v502, %v498
    %v823 = vpack.c.b16 %v503, %v499
    %v824 = vpack.c.b16 %v508, %v504
    %v825 = vpack.c.b16 %v509, %v505
    %v826 = vpack.c.b16 %v510, %v506
    %v827 = vpack.c.b16 %v511, %v507
    %v828 = vpack.c.b16 %v516, %v512
    %v829 = vpack.c.b16 %v517, %v513
    %v830 = vpack.c.b16 %v518, %v514
    %v831 = vpack.c.b16 %v519, %v515
    %v832 = vpack.c.b16 %v524, %v520
    %v833 = vpack.c.b16 %v525, %v521
    %v834 = vpack.c.b16 %v526, %v522
    %v835 = vpack.c.b16 %v527, %v523
    %v836 = vpack.c.b16 %v532, %v528
    %v837 = vpack.c.b16 %v533, %v529
    %v838 = vpack.c.b16 %v534, %v530
    %v839 = vpack.c.b16 %v535, %v531
    %v840 = vpack.c.b16 %v540, %v536
    %v841 = vpack.c.b16 %v541, %v537
    %v842 = vpack.c.b16 %v542, %v538
    %v843 = vpack.c.b16 %v543, %v539
    %v844 = vpack.c.b16 %v548, %v544
    %v845 = vpack.c.b16 %v549, %v545
    %v846 = vpack.c.b16 %v550, %v546
    %v847 = vpack.c.b16 %v551, %v547
    %v848 = vpack.c.b16 %v556, %v552
    %v849 = vpack.c.b16 %v557, %v553
    %v850 = vpack.c.b16 %v558, %v554
    %v851 = vpack.c.b16 %v559, %v555
    %v852 = vpack.c.b16 %v564, %v560
    %v853 = vpack.c.b16 %v565, %v561
    %v854 = vpack.c.b16 %v566, %v562
    %v855 = vpack.c.b16 %v567, %v563
    %v856 = vpack.c.b16 %v572, %v568
    %v857 = vpack.c.b16 %v573, %v569
    %v858 = vpack.c.b16 %v574, %v570
    %v859 = vpack.c.b16 %v575, %v571
    %v860 = vpack.c.b16 %v580, %v576
    %v861 = vpack.c.b16 %v581, %v577
    %v862 = vpack.c.b16 %v582, %v578
    %v863 = vpack.c.b16 %v583, %v579
    %v864 = vpack.c.b16 %v588, %v584
    %v865 = vpack.c.b16 %v589, %v585
    %v866 = vpack.c.b16 %v590, %v586
    %v867 = vpack.c.b16 %v591, %v587
    %v868 = vpack.c.b16 %v596, %v592
    %v869 = vpack.c.b16 %v597, %v593
    %v870 = vpack.c.b16 %v598, %v594
    %v871 = vpack.c.b16 %v599, %v595
    %v872 = vpack.c.b16 %v604, %v600
    %v873 = vpack.c.b16 %v605, %v601
    %v874 = vpack.c.b16 %v606, %v602
    %v875 = vpack.c.b16 %v607, %v603
    %v876 = vpack.c.b16 %v612, %v608
    %v877 = vpack.c.b16 %v613, %v609
    %v878 = vpack.c.b16 %v614, %v610
    %v879 = vpack.c.b16 %v615, %v611
    %v880 = vpack.c.b16 %v620, %v616
    %v881 = vpack.c.b16 %v621, %v617
    %v882 = vpack.c.b16 %v622, %v618
    %v883 = vpack.c.b16 %v623, %v619
    %v884 = vpack.c.b16 %v628, %v624
    %v885 = vpack.c.b16 %v629, %v625
    %v886 = vpack.c.b16 %v630, %v626
    %v887 = vpack.c.b16 %v631, %v627
    %v888 = vpack.c.b16 %v636, %v632
    %v889 = vpack.c.b16 %v637, %v633
    %v890 = vpack.c.b16 %v638, %v634
    %v891 = vpack.c.b16 %v639, %v635
    %v892 = vpack.c.b16 %v644, %v640
    %v893 = vpack.c.b16 %v645, %v641
    %v894 = vpack.c.b16 %v646, %v642
    %v895 = vpack.c.b16 %v647, %v643
    %v896 = vpack.c.b16 %v652, %v648
    %v897 = vpack.c.b16 %v653, %v649
    %v898 = vpack.c.b16 %v654, %v650
    %v899 = vpack.c.b16 %v655, %v651
    %v900 = vpack.c.b16 %v660, %v656
    %v901 = vpack.c.b16 %v661, %v657
    %v902 = vpack.c.b16 %v662, %v658
    %v903 = vpack.c.b16 %v663, %v659
    %v904 = vpack.c.b16 %v668, %v664
    %v905 = vpack.c.b16 %v669, %v665
    %v906 = vpack.c.b16 %v670, %v666
    %v907 = vpack.c.b16 %v671, %v667
    %v908 = vpack.c.b16 %v676, %v672
    %v909 = vpack.c.b16 %v677, %v673
    %v910 = vpack.c.b16 %v678, %v674
    %v911 = vpack.c.b16 %v679, %v675
    %v912 = vpack.c.b16 %v684, %v680
    %v913 = vpack.c.b16 %v685, %v681
    %v914 = vpack.c.b16 %v686, %v682
    %v915 = vpack.c.b16 %v687, %v683
    %v916 = vpack.c.b16 %v692, %v688
    %v917 = vpack.c.b16 %v693, %v689
    %v918 = vpack.c.b16 %v694, %v690
    %v919 = vpack.c.b16 %v695, %v691
    %v920 = vpack.c.b16 %v700, %v696
    %v921 = vpack.c.b16 %v701, %v697
    %v922 = vpack.c.b16 %v702, %v698
    %v923 = vpack.c.b16 %v703, %v699
    %v924 = vpack.c.b16 %v708, %v704
    %v925 = vpack.c.b16 %v709, %v705
    %v926 = vpack.c.b16 %v710, %v706
    %v927 = vpack.c.b16 %v711, %v707
    %v928 = vpack.c.b16 %v716, %v712
    %v929 = vpack.c.b16 %v717, %v713
    %v930 = vpack.c.b16 %v718, %v714
    %v931 = vpack.c.b16 %v719, %v715
    %v932 = vpack.c.b16 %v724, %v720
    %v933 = vpack.c.b16 %v725, %v721
    %v934 = vpack.c.b16 %v726, %v722
    %v935 = vpack.c.b16 %v727, %v723
    %v936 = vpack.c.b16 %v732, %v728
    %v937 = vpack.c.b16 %v733, %v729
    %v938 = vpack.c.b16 %v734, %v730
    %v939 = vpack.c.b16 %v735, %v731
    %v940 = vpack.c.b16 %v740, %v736
    %v941 = vpack.c.b16 %v741, %v737
    %v942 = vpack.c.b16 %v742, %v738
    %v943 = vpack.c.b16 %v743, %v739
    %v944 = vpack.c.b16 %v748, %v744
    %v945 = vpack.c.b16 %v749, %v745
    %v946 = vpack.c.b16 %v750, %v746
    %v947 = vpack.c.b16 %v751, %v747
    %v948 = vpack.c.b16 %v756, %v752
    %v949 = vpack.c.b16 %v757, %v753
    %v950 = vpack.c.b16 %v758, %v754
    %v951 = vpack.c.b16 %v759, %v755
    %v952 = vpack.c.b16 %v764, %v760
    %v953 = vpack.c.b16 %v765, %v761
    %v954 = vpack.c.b16 %v766, %v762
    %v955 = vpack.c.b16 %v767, %v763
    %v956 = vpack.c.b16 %v772, %v768
    %v957 = vpack.c.b16 %v773, %v769
    %v958 = vpack.c.b16 %v774, %v770
    %v959 = vpack.c.b16 %v775, %v771
    %v960 = vpack.c.b16 %v780, %v776
    %v961 = vpack.c.b16 %v781, %v777
    %v962 = vpack.c.b16 %v782, %v778
    %v963 = vpack.c.b16 %v783, %v779
    %v964 = vpack.c.b16 %v788, %v784
    %v965 = vpack.c.b16 %v789, %v785
    %v966 = vpack.c.b16 %v790, %v786
    %v967 = vpack.c.b16 %v791, %v787
    %v968 = vpack.c.b16 %v796, %v792
    %v969 = vpack.c.b16 %v797, %v793
    %v970 = vpack.c.b16 %v798, %v794
    %v971 = vpack.c.b16 %v799, %v795
    %v972 = vpack.c.b16 %v800, %v800
    %v973 = vpack.c.b16 %v801, %v801
    %v974 = vpack.c.b16 %v802, %v802
    %v975 = vpack.c.b16 %v803, %v803
    %vm1144 = vcmask 285696
    %v1146 = vsel %vm1144, %v286, 0
    %vm1148 = vcmask 1040384
    %vm1149 = vcmask 1041408
    %v1150 = vsel %vm1148, 4294967295, 65535
    %v1151 = vsel %vm1149, %v1150, 0
    %v1153 = vand.u32 %v972, %v1151
    %v1156 = vand.u32 %v973, %v1151
    %v1159 = vand.u32 %v974, %v1151
    %v1162 = vand.u32 %v975, %v1151
    %1164 = vmatprep.subr.bf16.mxu0 %v805
    %1165 = vmatpush1.bf16.msra.mxu0 %v804
    %1166 = vmatprep.subr.bf16.mxu0 %v809
    %1167 = vmatpush1.bf16.msra.mxu0 %v808
    %1168 = vmatprep.subr.bf16.mxu0 %v813
    %1169 = vmatpush1.bf16.msra.mxu0 %v812
    %1170 = vmatprep.subr.bf16.mxu0 %v817
    %1171 = vmatpush1.bf16.msra.mxu0 %v816
    %1172 = vmatprep.subr.bf16.mxu0 %v821
    %1173 = vmatpush1.bf16.msra.mxu0 %v820
    %1174 = vmatprep.subr.bf16.mxu0 %v825
    %1175 = vmatpush1.bf16.msra.mxu0 %v824
    %1176 = vmatprep.subr.bf16.mxu0 %v829
    %1177 = vmatpush1.bf16.msra.mxu0 %v828
    %1178 = vmatprep.subr.bf16.mxu0 %v833
    %1179 = vmatpush1.bf16.msra.mxu0 %v832
    %1180 = vmatprep.subr.bf16.mxu0 %v837
    %1181 = vmatpush1.bf16.msra.mxu0 %v836
    %1182 = vmatprep.subr.bf16.mxu0 %v841
    %1183 = vmatpush1.bf16.msra.mxu0 %v840
    %1184 = vmatprep.subr.bf16.mxu0 %v845
    %1185 = vmatpush1.bf16.msra.mxu0 %v844
    %1186 = vmatprep.subr.bf16.mxu0 %v849
    %1187 = vmatpush1.bf16.msra.mxu0 %v848
    %1188 = vmatprep.subr.bf16.mxu0 %v853
    %1189 = vmatpush1.bf16.msra.mxu0 %v852
    %1190 = vmatprep.subr.bf16.mxu0 %v857
    %1191 = vmatpush1.bf16.msra.mxu0 %v856
    %1192 = vmatprep.subr.bf16.mxu0 %v861
    %1193 = vmatpush1.bf16.msra.mxu0 %v860
    %1194 = vmatprep.subr.bf16.mxu0 %v865
    %1195 = vmatpush1.bf16.msra.mxu0 %v864
    %1196 = vmatprep.mubr.bf16.mxu0 %v279
    %1197 = vmatmul.mubr.bf16.gmra.mrb[0].mxu0 %v265
    %v1198 = vpop.f32.mrb[0].mxu0
    %v1199 = vadd.f32 %v224, %v1198
    %v1200 = vpop.f32.mrb[0].mxu0
    %v1201 = vadd.f32 %v228, %v1200
    %v1202 = vpop.f32.mrb[0].mxu0
    %v1203 = vpop.f32.mrb[0].mxu0
    %1204 = vdwg.mxu0
    %1205 = vmatprep.subr.bf16.mxu0 %v869
    %1206 = vmatpush1.bf16.msra.mxu0 %v868
    %1207 = vmatprep.subr.bf16.mxu0 %v873
    %1208 = vmatpush1.bf16.msra.mxu0 %v872
    %1209 = vmatprep.subr.bf16.mxu0 %v877
    %1210 = vmatpush1.bf16.msra.mxu0 %v876
    %1211 = vmatprep.subr.bf16.mxu0 %v881
    %1212 = vmatpush1.bf16.msra.mxu0 %v880
    %1213 = vmatprep.subr.bf16.mxu0 %v885
    %1214 = vmatpush1.bf16.msra.mxu0 %v884
    %1215 = vmatprep.subr.bf16.mxu0 %v889
    %1216 = vmatpush1.bf16.msra.mxu0 %v888
    %1217 = vmatprep.subr.bf16.mxu0 %v893
    %1218 = vmatpush1.bf16.msra.mxu0 %v892
    %1219 = vmatprep.subr.bf16.mxu0 %v897
    %1220 = vmatpush1.bf16.msra.mxu0 %v896
    %1221 = vmatprep.subr.bf16.mxu0 %v901
    %1222 = vmatpush1.bf16.msra.mxu0 %v900
    %1223 = vmatprep.subr.bf16.mxu0 %v905
    %1224 = vmatpush1.bf16.msra.mxu0 %v904
    %1225 = vmatprep.subr.bf16.mxu0 %v909
    %1226 = vmatpush1.bf16.msra.mxu0 %v908
    %1227 = vmatprep.subr.bf16.mxu0 %v913
    %1228 = vmatpush1.bf16.msra.mxu0 %v912
    %1229 = vmatprep.subr.bf16.mxu0 %v917
    %1230 = vmatpush1.bf16.msra.mxu0 %v916
    %1231 = vmatprep.subr.bf16.mxu0 %v921
    %1232 = vmatpush1.bf16.msra.mxu0 %v920
    %1233 = vmatprep.subr.bf16.mxu0 %v925
    %1234 = vmatpush1.bf16.msra.mxu0 %v924
    %1235 = vmatprep.subr.bf16.mxu0 %v929
    %1236 = vmatpush1.bf16.msra.mxu0 %v928
    %1237 = vmatprep.mubr.bf16.mxu0 %v288
    %1238 = vmatmul.mubr.bf16.gmra.mrb[0].mxu0 %v287
    %v1239 = vpop.f32.mrb[0].mxu0
    %v1240 = vadd.f32 %v1199, %v1239
    %v1241 = vpop.f32.mrb[0].mxu0
    %v1242 = vadd.f32 %v1201, %v1241
    %v1243 = vpop.f32.mrb[0].mxu0
    %v1244 = vpop.f32.mrb[0].mxu0
    %1245 = vdwg.mxu0
    %1246 = vmatprep.subr.bf16.mxu0 %v933
    %1247 = vmatpush1.bf16.msra.mxu0 %v932
    %1248 = vmatprep.subr.bf16.mxu0 %v937
    %1249 = vmatpush1.bf16.msra.mxu0 %v936
    %1250 = vmatprep.subr.bf16.mxu0 %v941
    %1251 = vmatpush1.bf16.msra.mxu0 %v940
    %1252 = vmatprep.subr.bf16.mxu0 %v945
    %1253 = vmatpush1.bf16.msra.mxu0 %v944
    %1254 = vmatprep.subr.bf16.mxu0 %v949
    %1255 = vmatpush1.bf16.msra.mxu0 %v948
    %1256 = vmatprep.subr.bf16.mxu0 %v953
    %1257 = vmatpush1.bf16.msra.mxu0 %v952
    %1258 = vmatprep.subr.bf16.mxu0 %v957
    %1259 = vmatpush1.bf16.msra.mxu0 %v956
    %1260 = vmatprep.subr.bf16.mxu0 %v961
    %1261 = vmatpush1.bf16.msra.mxu0 %v960
    %1262 = vmatprep.subr.bf16.mxu0 %v965
    %1263 = vmatpush1.bf16.msra.mxu0 %v964
    %1264 = vmatprep.subr.bf16.mxu0 %v969
    %1265 = vmatpush1.bf16.msra.mxu0 %v968
    %1266 = vmatprep.subr.bf16.mxu0 %v1156
    %1267 = vmatpush1.bf16.msra.mxu0 %v1153
    %1268 = vmatprep.subr.bf16.mxu0 0
    %1269 = vmatpush1.bf16.msra.mxu0 0
    %1270 = vmatprep.subr.bf16.mxu0 0
    %1271 = vmatpush1.bf16.msra.mxu0 0
    %1272 = vmatprep.subr.bf16.mxu0 0
    %1273 = vmatpush1.bf16.msra.mxu0 0
    %1274 = vmatprep.subr.bf16.mxu0 0
    %1275 = vmatpush1.bf16.msra.mxu0 0
    %1276 = vmatprep.subr.bf16.mxu0 0
    %1277 = vmatpush1.bf16.msra.mxu0 0
    %1278 = vmatprep.mubr.bf16.mxu0 %v1146
    %1279 = vmatmul.mubr.bf16.gmra.mrb[0].mxu0 %v272
    %v1280 = vpop.f32.mrb[0].mxu0
    %v1281 = vadd.f32 %v1240, %v1280
    %v1282 = vpop.f32.mrb[0].mxu0
    %v1283 = vadd.f32 %v1242, %v1282
    %v1284 = vpop.f32.mrb[0].mxu0
    %v1285 = vpop.f32.mrb[0].mxu0
    %1286 = vdwg.mxu0
    %1287 = vmatprep.subr.bf16.mxu0 %v807
    %1288 = vmatpush1.bf16.msra.mxu0 %v806
    %1289 = vmatprep.subr.bf16.mxu0 %v811
    %1290 = vmatpush1.bf16.msra.mxu0 %v810
    %1291 = vmatprep.subr.bf16.mxu0 %v815
    %1292 = vmatpush1.bf16.msra.mxu0 %v814
    %1293 = vmatprep.subr.bf16.mxu0 %v819
    %1294 = vmatpush1.bf16.msra.mxu0 %v818
    %1295 = vmatprep.subr.bf16.mxu0 %v823
    %1296 = vmatpush1.bf16.msra.mxu0 %v822
    %1297 = vmatprep.subr.bf16.mxu0 %v827
    %1298 = vmatpush1.bf16.msra.mxu0 %v826
    %1299 = vmatprep.subr.bf16.mxu0 %v831
    %1300 = vmatpush1.bf16.msra.mxu0 %v830
    %1301 = vmatprep.subr.bf16.mxu0 %v835
    %1302 = vmatpush1.bf16.msra.mxu0 %v834
    %1303 = vmatprep.subr.bf16.mxu0 %v839
    %1304 = vmatpush1.bf16.msra.mxu0 %v838
    %1305 = vmatprep.subr.bf16.mxu0 %v843
    %1306 = vmatpush1.bf16.msra.mxu0 %v842
    %1307 = vmatprep.subr.bf16.mxu0 %v847
    %1308 = vmatpush1.bf16.msra.mxu0 %v846
    %1309 = vmatprep.subr.bf16.mxu0 %v851
    %1310 = vmatpush1.bf16.msra.mxu0 %v850
    %1311 = vmatprep.subr.bf16.mxu0 %v855
    %1312 = vmatpush1.bf16.msra.mxu0 %v854
    %1313 = vmatprep.subr.bf16.mxu0 %v859
    %1314 = vmatpush1.bf16.msra.mxu0 %v858
    %1315 = vmatprep.subr.bf16.mxu0 %v863
    %1316 = vmatpush1.bf16.msra.mxu0 %v862
    %1317 = vmatprep.subr.bf16.mxu0 %v867
    %1318 = vmatpush1.bf16.msra.mxu0 %v866
    %1319 = vmatprep.mubr.bf16.mxu0 %v279
    %1320 = vmatmul.mubr.bf16.gmra.mrb[0].mxu0 %v265
    %v1321 = vpop.f32.mrb[0].mxu0
    %v1322 = vadd.f32 %v232, %v1321
    %v1323 = vpop.f32.mrb[0].mxu0
    %v1324 = vadd.f32 %v236, %v1323
    %v1325 = vpop.f32.mrb[0].mxu0
    %v1326 = vpop.f32.mrb[0].mxu0
    %1327 = vdwg.mxu0
    %1328 = vmatprep.subr.bf16.mxu0 %v871
    %1329 = vmatpush1.bf16.msra.mxu0 %v870
    %1330 = vmatprep.subr.bf16.mxu0 %v875
    %1331 = vmatpush1.bf16.msra.mxu0 %v874
    %1332 = vmatprep.subr.bf16.mxu0 %v879
    %1333 = vmatpush1.bf16.msra.mxu0 %v878
    %1334 = vmatprep.subr.bf16.mxu0 %v883
    %1335 = vmatpush1.bf16.msra.mxu0 %v882
    %1336 = vmatprep.subr.bf16.mxu0 %v887
    %1337 = vmatpush1.bf16.msra.mxu0 %v886
    %1338 = vmatprep.subr.bf16.mxu0 %v891
    %1339 = vmatpush1.bf16.msra.mxu0 %v890
    %1340 = vmatprep.subr.bf16.mxu0 %v895
    %1341 = vmatpush1.bf16.msra.mxu0 %v894
    %1342 = vmatprep.subr.bf16.mxu0 %v899
    %1343 = vmatpush1.bf16.msra.mxu0 %v898
    %1344 = vmatprep.subr.bf16.mxu0 %v903
    %1345 = vmatpush1.bf16.msra.mxu0 %v902
    %1346 = vmatprep.subr.bf16.mxu0 %v907
    %1347 = vmatpush1.bf16.msra.mxu0 %v906
    %1348 = vmatprep.subr.bf16.mxu0 %v911
    %1349 = vmatpush1.bf16.msra.mxu0 %v910
    %1350 = vmatprep.subr.bf16.mxu0 %v915
    %1351 = vmatpush1.bf16.msra.mxu0 %v914
    %1352 = vmatprep.subr.bf16.mxu0 %v919
    %1353 = vmatpush1.bf16.msra.mxu0 %v918
    %1354 = vmatprep.subr.bf16.mxu0 %v923
    %1355 = vmatpush1.bf16.msra.mxu0 %v922
    %1356 = vmatprep.subr.bf16.mxu0 %v927
    %1357 = vmatpush1.bf16.msra.mxu0 %v926
    %1358 = vmatprep.subr.bf16.mxu0 %v931
    %1359 = vmatpush1.bf16.msra.mxu0 %v930
    %1360 = vmatprep.mubr.bf16.mxu0 %v288
    %1361 = vmatmul.mubr.bf16.gmra.mrb[0].mxu0 %v287
    %v1362 = vpop.f32.mrb[0].mxu0
    %v1363 = vadd.f32 %v1322, %v1362
    %v1364 = vpop.f32.mrb[0].mxu0
    %v1365 = vadd.f32 %v1324, %v1364
    %v1366 = vpop.f32.mrb[0].mxu0
    %v1367 = vpop.f32.mrb[0].mxu0
    %1368 = vdwg.mxu0
    %1369 = vmatprep.subr.bf16.mxu0 %v935
    %1370 = vmatpush1.bf16.msra.mxu0 %v934
    %1371 = vmatprep.subr.bf16.mxu0 %v939
    %1372 = vmatpush1.bf16.msra.mxu0 %v938
    %1373 = vmatprep.subr.bf16.mxu0 %v943
    %1374 = vmatpush1.bf16.msra.mxu0 %v942
    %1375 = vmatprep.subr.bf16.mxu0 %v947
    %1376 = vmatpush1.bf16.msra.mxu0 %v946
    %1377 = vmatprep.subr.bf16.mxu0 %v951
    %1378 = vmatpush1.bf16.msra.mxu0 %v950
    %1379 = vmatprep.subr.bf16.mxu0 %v955
    %1380 = vmatpush1.bf16.msra.mxu0 %v954
    %1381 = vmatprep.subr.bf16.mxu0 %v959
    %1382 = vmatpush1.bf16.msra.mxu0 %v958
    %1383 = vmatprep.subr.bf16.mxu0 %v963
    %1384 = vmatpush1.bf16.msra.mxu0 %v962
    %1385 = vmatprep.subr.bf16.mxu0 %v967
    %1386 = vmatpush1.bf16.msra.mxu0 %v966
    %1387 = vmatprep.subr.bf16.mxu0 %v971
    %1388 = vmatpush1.bf16.msra.mxu0 %v970
    %1389 = vmatprep.subr.bf16.mxu0 %v1162
    %1390 = vmatpush1.bf16.msra.mxu0 %v1159
    %1391 = vmatprep.subr.bf16.mxu0 0
    %1392 = vmatpush1.bf16.msra.mxu0 0
    %1393 = vmatprep.subr.bf16.mxu0 0
    %1394 = vmatpush1.bf16.msra.mxu0 0
    %1395 = vmatprep.subr.bf16.mxu0 0
    %1396 = vmatpush1.bf16.msra.mxu0 0
    %1397 = vmatprep.subr.bf16.mxu0 0
    %1398 = vmatpush1.bf16.msra.mxu0 0
    %1399 = vmatprep.subr.bf16.mxu0 0
    %1400 = vmatpush1.bf16.msra.mxu0 0
    %1401 = vmatprep.mubr.bf16.mxu0 %v1146
    %1402 = vmatmul.mubr.bf16.gmra.mrb[0].mxu0 %v272
    %v1403 = vpop.f32.mrb[0].mxu0
    %v1404 = vadd.f32 %v1363, %v1403
    %v1405 = vpop.f32.mrb[0].mxu0
    %v1406 = vadd.f32 %v1365, %v1405
    %v1407 = vpop.f32.mrb[0].mxu0
    %v1408 = vpop.f32.mrb[0].mxu0
    %1409 = vdwg.mxu0
    %v1410 = vmax.f32 %v1281, 0.0
    %v1411 = vmax.f32 %v1283, 0.0
    %v1412 = vmax.f32 %v1404, 0.0
    %v1413 = vmax.f32 %v1406, 0.0
    %v1414 = vpack.c.bf16 %v1410, %v1410
    %v1415 = vpack.c.bf16 %v1411, %v1411
    %v1416 = vpack.c.bf16 %v1412, %v1412
    %v1417 = vpack.c.bf16 %v1413, %v1413
    %v1418 = vld [vmem:[%s3] sm:$0xf]
    %v1419 = vld [vmem:[%s3 + $0x4] sm:$0xf]
    %v1420 = vld [vmem:[%s3 + $0x8] sm:$0xf]
    %v1421 = vld [vmem:[%s3 + $0xc] sm:$0xf]
    %v1422 = vld [vmem:[%s3 + $0x10] sm:$0xf]
    %v1423 = vld [vmem:[%s3 + $0x14] sm:$0xf]
    %v1424 = vld [vmem:[%s3 + $0x18] sm:$0xf]
    %v1425 = vld [vmem:[%s3 + $0x1c] sm:$0xf]
    %v1426 = vld [vmem:[%s3 + $0x20] sm:$0xf]
    %v1427 = vld [vmem:[%s3 + $0x24] sm:$0xf]
    %v1428 = vld [vmem:[%s3 + $0x28] sm:$0xf]
    %v1429 = vld [vmem:[%s3 + $0x2c] sm:$0xf]
    %v1430 = vld [vmem:[%s3 + $0x30] sm:$0xf]
    %v1431 = vld [vmem:[%s3 + $0x34] sm:$0xf]
    %v1432 = vld [vmem:[%s3 + $0x38] sm:$0xf]
    %v1433 = vld [vmem:[%s3 + $0x3c] sm:$0xf]
    %v1434 = vld [vmem:[%s3 + $0x40] sm:$0xf]
    %v1435 = vld [vmem:[%s3 + $0x44] sm:$0xf]
    %v1436 = vld [vmem:[%s3 + $0x48] sm:$0xf]
    %v1437 = vld [vmem:[%s3 + $0x4c] sm:$0xf]
    %v1438 = vld [vmem:[%s3 + $0x50] sm:$0xf]
    %v1439 = vld [vmem:[%s3 + $0x54] sm:$0xf]
    %v1440 = vld [vmem:[%s3 + $0x58] sm:$0xf]
    %v1441 = vld [vmem:[%s3 + $0x5c] sm:$0xf]
    %v1442 = vld [vmem:[%s3 + $0x60] sm:$0xf]
    %v1443 = vld [vmem:[%s3 + $0x64] sm:$0xf]
    %v1444 = vld [vmem:[%s3 + $0x68] sm:$0xf]
    %v1445 = vld [vmem:[%s3 + $0x6c] sm:$0xf]
    %v1446 = vld [vmem:[%s3 + $0x70] sm:$0xf]
    %v1447 = vld [vmem:[%s3 + $0x74] sm:$0xf]
    %v1448 = vld [vmem:[%s3 + $0x78] sm:$0xf]
    %v1449 = vld [vmem:[%s3 + $0x7c] sm:$0xf]
    %v1450 = vld [vmem:[%s3 + $0x80] sm:$0xf]
    %v1451 = vld [vmem:[%s3 + $0x84] sm:$0xf]
    %v1452 = vld [vmem:[%s3 + $0x88] sm:$0xf]
    %v1453 = vld [vmem:[%s3 + $0x8c] sm:$0xf]
    %v1454 = vld [vmem:[%s3 + $0x90] sm:$0xf]
    %v1455 = vld [vmem:[%s3 + $0x94] sm:$0xf]
    %v1456 = vld [vmem:[%s3 + $0x98] sm:$0xf]
    %v1457 = vld [vmem:[%s3 + $0x9c] sm:$0xf]
    %v1458 = vld [vmem:[%s3 + $0xa0] sm:$0xf]
    %v1459 = vld [vmem:[%s3 + $0xa4] sm:$0xf]
    %v1460 = vld [vmem:[%s3 + $0xa8] sm:$0xf]
    %v1461 = vld [vmem:[%s3 + $0xac] sm:$0xf]
    %v1462 = vld [vmem:[%s3 + $0xb0] sm:$0xf]
    %v1463 = vld [vmem:[%s3 + $0xb4] sm:$0xf]
    %v1464 = vld [vmem:[%s3 + $0xb8] sm:$0xf]
    %v1465 = vld [vmem:[%s3 + $0xbc] sm:$0xf]
    %v1466 = vld [vmem:[%s3 + $0xc0] sm:$0xf]
    %v1467 = vld [vmem:[%s3 + $0xc4] sm:$0xf]
    %v1468 = vld [vmem:[%s3 + $0xc8] sm:$0xf]
    %v1469 = vld [vmem:[%s3 + $0xcc] sm:$0xf]
    %v1470 = vld [vmem:[%s3 + $0xd0] sm:$0xf]
    %v1471 = vld [vmem:[%s3 + $0xd4] sm:$0xf]
    %v1472 = vld [vmem:[%s3 + $0xd8] sm:$0xf]
    %v1473 = vld [vmem:[%s3 + $0xdc] sm:$0xf]
    %v1474 = vld [vmem:[%s3 + $0xe0] sm:$0xf]
    %v1475 = vld [vmem:[%s3 + $0xe4] sm:$0xf]
    %v1476 = vld [vmem:[%s3 + $0xe8] sm:$0xf]
    %v1477 = vld [vmem:[%s3 + $0xec] sm:$0xf]
    %v1478 = vld [vmem:[%s3 + $0xf0] sm:$0xf]
    %v1479 = vld [vmem:[%s3 + $0xf4] sm:$0xf]
    %v1480 = vld [vmem:[%s3 + $0xf8] sm:$0xf]
    %v1481 = vld [vmem:[%s3 + $0xfc] sm:$0xf]
    %v1482 = vld [vmem:[%s4] sm:$0x1]
    %v1484 = vlaneseq
    %v1485 = vshrl.u32 %v1484, 7
    %v1486 = vsub.s32 0, %v1485
    %v1487 = vrot.slane %v1482, %v1486
    %v1553 = vunpack.c.l.b16 %v1418
    %v1554 = vunpack.c.l.b16 %v1419
    %v1555 = vunpack.c.l.b16 %v1420
    %v1556 = vunpack.c.l.b16 %v1421
    %v1557 = vunpack.c.l.b16 %v1422
    %v1558 = vunpack.c.l.b16 %v1423
    %v1559 = vunpack.c.l.b16 %v1424
    %v1560 = vunpack.c.l.b16 %v1425
    %v1561 = vunpack.c.l.b16 %v1426
    %v1562 = vunpack.c.l.b16 %v1427
    %v1563 = vunpack.c.l.b16 %v1428
    %v1564 = vunpack.c.l.b16 %v1429
    %v1565 = vunpack.c.l.b16 %v1430
    %v1566 = vunpack.c.l.b16 %v1431
    %v1567 = vunpack.c.l.b16 %v1432
    %v1568 = vunpack.c.l.b16 %v1433
    %v1569 = vunpack.c.l.b16 %v1434
    %v1570 = vunpack.c.l.b16 %v1435
    %v1571 = vunpack.c.l.b16 %v1436
    %v1572 = vunpack.c.l.b16 %v1437
    %v1573 = vunpack.c.l.b16 %v1438
    %v1574 = vunpack.c.l.b16 %v1439
    %v1575 = vunpack.c.l.b16 %v1440
    %v1576 = vunpack.c.l.b16 %v1441
    %v1577 = vunpack.c.l.b16 %v1442
    %v1578 = vunpack.c.l.b16 %v1443
    %v1579 = vunpack.c.l.b16 %v1444
    %v1580 = vunpack.c.l.b16 %v1445
    %v1581 = vunpack.c.l.b16 %v1446
    %v1582 = vunpack.c.l.b16 %v1447
    %v1583 = vunpack.c.l.b16 %v1448
    %v1584 = vunpack.c.l.b16 %v1449
    %v1585 = vunpack.c.l.b16 %v1450
    %v1586 = vunpack.c.l.b16 %v1451
    %v1587 = vunpack.c.l.b16 %v1452
    %v1588 = vunpack.c.l.b16 %v1453
    %v1589 = vunpack.c.l.b16 %v1454
    %v1590 = vunpack.c.l.b16 %v1455
    %v1591 = vunpack.c.l.b16 %v1456
    %v1592 = vunpack.c.l.b16 %v1457
    %v1593 = vunpack.c.l.b16 %v1458
    %v1594 = vunpack.c.l.b16 %v1459
    %v1595 = vunpack.c.l.b16 %v1460
    %v1596 = vunpack.c.l.b16 %v1461
    %v1597 = vunpack.c.l.b16 %v1462
    %v1598 = vunpack.c.l.b16 %v1463
    %v1599 = vunpack.c.l.b16 %v1464
    %v1600 = vunpack.c.l.b16 %v1465
    %v1601 = vunpack.c.l.b16 %v1466
    %v1602 = vunpack.c.l.b16 %v1467
    %v1603 = vunpack.c.l.b16 %v1468
    %v1604 = vunpack.c.l.b16 %v1469
    %v1605 = vunpack.c.l.b16 %v1470
    %v1606 = vunpack.c.l.b16 %v1471
    %v1607 = vunpack.c.l.b16 %v1472
    %v1608 = vunpack.c.l.b16 %v1473
    %v1609 = vunpack.c.l.b16 %v1474
    %v1610 = vunpack.c.l.b16 %v1475
    %v1611 = vunpack.c.l.b16 %v1476
    %v1612 = vunpack.c.l.b16 %v1477
    %v1613 = vunpack.c.l.b16 %v1478
    %v1614 = vunpack.c.l.b16 %v1479
    %v1615 = vunpack.c.l.b16 %v1480
    %v1616 = vunpack.c.l.b16 %v1481
    %v1617 = vpack.c.b16 %v1554, %v1553
    %v1618 = vpack.c.b16 %v1556, %v1555
    %v1619 = vpack.c.b16 %v1558, %v1557
    %v1620 = vpack.c.b16 %v1560, %v1559
    %v1621 = vpack.c.b16 %v1562, %v1561
    %v1622 = vpack.c.b16 %v1564, %v1563
    %v1623 = vpack.c.b16 %v1566, %v1565
    %v1624 = vpack.c.b16 %v1568, %v1567
    %v1625 = vpack.c.b16 %v1570, %v1569
    %v1626 = vpack.c.b16 %v1572, %v1571
    %v1627 = vpack.c.b16 %v1574, %v1573
    %v1628 = vpack.c.b16 %v1576, %v1575
    %v1629 = vpack.c.b16 %v1578, %v1577
    %v1630 = vpack.c.b16 %v1580, %v1579
    %v1631 = vpack.c.b16 %v1582, %v1581
    %v1632 = vpack.c.b16 %v1584, %v1583
    %v1633 = vpack.c.b16 %v1586, %v1585
    %v1634 = vpack.c.b16 %v1588, %v1587
    %v1635 = vpack.c.b16 %v1590, %v1589
    %v1636 = vpack.c.b16 %v1592, %v1591
    %v1637 = vpack.c.b16 %v1594, %v1593
    %v1638 = vpack.c.b16 %v1596, %v1595
    %v1639 = vpack.c.b16 %v1598, %v1597
    %v1640 = vpack.c.b16 %v1600, %v1599
    %v1641 = vpack.c.b16 %v1602, %v1601
    %v1642 = vpack.c.b16 %v1604, %v1603
    %v1643 = vpack.c.b16 %v1606, %v1605
    %v1644 = vpack.c.b16 %v1608, %v1607
    %v1645 = vpack.c.b16 %v1610, %v1609
    %v1646 = vpack.c.b16 %v1612, %v1611
    %v1647 = vpack.c.b16 %v1614, %v1613
    %v1648 = vpack.c.b16 %v1616, %v1615
    %1681 = vmatprep.subr.bf16.mxu0 0
    %1682 = vmatpush1.bf16.msra.mxu0 %v1617
    %1683 = vmatprep.subr.bf16.mxu0 0
    %1684 = vmatpush1.bf16.msra.mxu0 %v1618
    %1685 = vmatprep.subr.bf16.mxu0 0
    %1686 = vmatpush1.bf16.msra.mxu0 %v1619
    %1687 = vmatprep.subr.bf16.mxu0 0
    %1688 = vmatpush1.bf16.msra.mxu0 %v1620
    %1689 = vmatprep.subr.bf16.mxu0 0
    %1690 = vmatpush1.bf16.msra.mxu0 %v1621
    %1691 = vmatprep.subr.bf16.mxu0 0
    %1692 = vmatpush1.bf16.msra.mxu0 %v1622
    %1693 = vmatprep.subr.bf16.mxu0 0
    %1694 = vmatpush1.bf16.msra.mxu0 %v1623
    %1695 = vmatprep.subr.bf16.mxu0 0
    %1696 = vmatpush1.bf16.msra.mxu0 %v1624
    %1697 = vmatprep.subr.bf16.mxu0 0
    %1698 = vmatpush1.bf16.msra.mxu0 %v1625
    %1699 = vmatprep.subr.bf16.mxu0 0
    %1700 = vmatpush1.bf16.msra.mxu0 %v1626
    %1701 = vmatprep.subr.bf16.mxu0 0
    %1702 = vmatpush1.bf16.msra.mxu0 %v1627
    %1703 = vmatprep.subr.bf16.mxu0 0
    %1704 = vmatpush1.bf16.msra.mxu0 %v1628
    %1705 = vmatprep.subr.bf16.mxu0 0
    %1706 = vmatpush1.bf16.msra.mxu0 %v1629
    %1707 = vmatprep.subr.bf16.mxu0 0
    %1708 = vmatpush1.bf16.msra.mxu0 %v1630
    %1709 = vmatprep.subr.bf16.mxu0 0
    %1710 = vmatpush1.bf16.msra.mxu0 %v1631
    %1711 = vmatprep.subr.bf16.mxu0 0
    %1712 = vmatpush1.bf16.msra.mxu0 %v1632
    %1713 = vmatprep.mubr.bf16.mxu0 %v1415
    %1714 = vmatmul.mubr.bf16.gmra.mrb[0].mxu0 %v1414
    %v1715 = vpop.f32.mrb[0].mxu0
    %v1716 = vadd.f32 %v1487, %v1715
    %v1717 = vpop.f32.mrb[0].mxu0
    %v1718 = vpop.f32.mrb[0].mxu0
    %v1719 = vpop.f32.mrb[0].mxu0
    %1720 = vdwg.mxu0
    %1721 = vmatprep.subr.bf16.mxu0 0
    %1722 = vmatpush1.bf16.msra.mxu0 %v1633
    %1723 = vmatprep.subr.bf16.mxu0 0
    %1724 = vmatpush1.bf16.msra.mxu0 %v1634
    %1725 = vmatprep.subr.bf16.mxu0 0
    %1726 = vmatpush1.bf16.msra.mxu0 %v1635
    %1727 = vmatprep.subr.bf16.mxu0 0
    %1728 = vmatpush1.bf16.msra.mxu0 %v1636
    %1729 = vmatprep.subr.bf16.mxu0 0
    %1730 = vmatpush1.bf16.msra.mxu0 %v1637
    %1731 = vmatprep.subr.bf16.mxu0 0
    %1732 = vmatpush1.bf16.msra.mxu0 %v1638
    %1733 = vmatprep.subr.bf16.mxu0 0
    %1734 = vmatpush1.bf16.msra.mxu0 %v1639
    %1735 = vmatprep.subr.bf16.mxu0 0
    %1736 = vmatpush1.bf16.msra.mxu0 %v1640
    %1737 = vmatprep.subr.bf16.mxu0 0
    %1738 = vmatpush1.bf16.msra.mxu0 %v1641
    %1739 = vmatprep.subr.bf16.mxu0 0
    %1740 = vmatpush1.bf16.msra.mxu0 %v1642
    %1741 = vmatprep.subr.bf16.mxu0 0
    %1742 = vmatpush1.bf16.msra.mxu0 %v1643
    %1743 = vmatprep.subr.bf16.mxu0 0
    %1744 = vmatpush1.bf16.msra.mxu0 %v1644
    %1745 = vmatprep.subr.bf16.mxu0 0
    %1746 = vmatpush1.bf16.msra.mxu0 %v1645
    %1747 = vmatprep.subr.bf16.mxu0 0
    %1748 = vmatpush1.bf16.msra.mxu0 %v1646
    %1749 = vmatprep.subr.bf16.mxu0 0
    %1750 = vmatpush1.bf16.msra.mxu0 %v1647
    %1751 = vmatprep.subr.bf16.mxu0 0
    %1752 = vmatpush1.bf16.msra.mxu0 %v1648
    %1753 = vmatprep.mubr.bf16.mxu0 %v1417
    %1754 = vmatmul.mubr.bf16.gmra.mrb[0].mxu0 %v1416
    %v1755 = vpop.f32.mrb[0].mxu0
    %v1756 = vadd.f32 %v1716, %v1755
    %v1757 = vpop.f32.mrb[0].mxu0
    %v1758 = vpop.f32.mrb[0].mxu0
    %v1759 = vpop.f32.mrb[0].mxu0
    %1760 = vdwg.mxu0
    %v1761 = vmax.f32 %v1756, 0.0
    %v1762 = vpack.c.bf16 %v1761, %v1761
    %v1763 = vld [vmem:[%s5] sm:$0xf]
    %v1764 = vld [vmem:[%s5 + $0x4] sm:$0xf]
    %v1765 = vld [vmem:[%s5 + $0x8] sm:$0xf]
    %v1766 = vld [vmem:[%s5 + $0xc] sm:$0xf]
    %v1767 = vld [vmem:[%s5 + $0x10] sm:$0xf]
    %v1768 = vld [vmem:[%s5 + $0x14] sm:$0xf]
    %v1769 = vld [vmem:[%s5 + $0x18] sm:$0xf]
    %v1770 = vld [vmem:[%s5 + $0x1c] sm:$0xf]
    %v1771 = vld [vmem:[%s5 + $0x20] sm:$0xf]
    %v1772 = vld [vmem:[%s5 + $0x24] sm:$0xf]
    %v1773 = vld [vmem:[%s5 + $0x28] sm:$0xf]
    %v1774 = vld [vmem:[%s5 + $0x2c] sm:$0xf]
    %v1775 = vld [vmem:[%s5 + $0x30] sm:$0xf]
    %v1776 = vld [vmem:[%s5 + $0x34] sm:$0xf]
    %v1777 = vld [vmem:[%s5 + $0x38] sm:$0xf]
    %v1778 = vld [vmem:[%s5 + $0x3c] sm:$0xf]
    %v1779 = vld [vmem:[%s6] sm:$0x1]
    %v1781 = vlaneseq
    %v1782 = vshrl.u32 %v1781, 7
    %v1783 = vsub.s32 0, %v1782
    %v1784 = vrot.slane %v1779, %v1783
    %v1802 = vunpack.c.l.b16 %v1763
    %v1803 = vunpack.c.l.b16 %v1764
    %v1804 = vunpack.c.l.b16 %v1765
    %v1805 = vunpack.c.l.b16 %v1766
    %v1806 = vunpack.c.l.b16 %v1767
    %v1807 = vunpack.c.l.b16 %v1768
    %v1808 = vunpack.c.l.b16 %v1769
    %v1809 = vunpack.c.l.b16 %v1770
    %v1810 = vunpack.c.l.b16 %v1771
    %v1811 = vunpack.c.l.b16 %v1772
    %v1812 = vunpack.c.l.b16 %v1773
    %v1813 = vunpack.c.l.b16 %v1774
    %v1814 = vunpack.c.l.b16 %v1775
    %v1815 = vunpack.c.l.b16 %v1776
    %v1816 = vunpack.c.l.b16 %v1777
    %v1817 = vunpack.c.l.b16 %v1778
    %v1818 = vpack.c.b16 %v1803, %v1802
    %v1819 = vpack.c.b16 %v1805, %v1804
    %v1820 = vpack.c.b16 %v1807, %v1806
    %v1821 = vpack.c.b16 %v1809, %v1808
    %v1822 = vpack.c.b16 %v1811, %v1810
    %v1823 = vpack.c.b16 %v1813, %v1812
    %v1824 = vpack.c.b16 %v1815, %v1814
    %v1825 = vpack.c.b16 %v1817, %v1816
    %1834 = vmatprep.subr.bf16.mxu0 0
    %1835 = vmatpush1.bf16.msra.mxu0 %v1818
    %1836 = vmatprep.subr.bf16.mxu0 0
    %1837 = vmatpush1.bf16.msra.mxu0 %v1819
    %1838 = vmatprep.subr.bf16.mxu0 0
    %1839 = vmatpush1.bf16.msra.mxu0 %v1820
    %1840 = vmatprep.subr.bf16.mxu0 0
    %1841 = vmatpush1.bf16.msra.mxu0 %v1821
    %1842 = vmatprep.subr.bf16.mxu0 0
    %1843 = vmatpush1.bf16.msra.mxu0 %v1822
    %1844 = vmatprep.subr.bf16.mxu0 0
    %1845 = vmatpush1.bf16.msra.mxu0 %v1823
    %1846 = vmatprep.subr.bf16.mxu0 0
    %1847 = vmatpush1.bf16.msra.mxu0 %v1824
    %1848 = vmatprep.subr.bf16.mxu0 0
    %1849 = vmatpush1.bf16.msra.mxu0 %v1825
    %1850 = vmatprep.subr.bf16.mxu0 0
    %1851 = vmatpush1.bf16.msra.mxu0 0
    %1852 = vmatprep.subr.bf16.mxu0 0
    %1853 = vmatpush1.bf16.msra.mxu0 0
    %1854 = vmatprep.subr.bf16.mxu0 0
    %1855 = vmatpush1.bf16.msra.mxu0 0
    %1856 = vmatprep.subr.bf16.mxu0 0
    %1857 = vmatpush1.bf16.msra.mxu0 0
    %1858 = vmatprep.subr.bf16.mxu0 0
    %1859 = vmatpush1.bf16.msra.mxu0 0
    %1860 = vmatprep.subr.bf16.mxu0 0
    %1861 = vmatpush1.bf16.msra.mxu0 0
    %1862 = vmatprep.subr.bf16.mxu0 0
    %1863 = vmatpush1.bf16.msra.mxu0 0
    %1864 = vmatprep.subr.bf16.mxu0 0
    %1865 = vmatpush1.bf16.msra.mxu0 0
    %1866 = vmatprep.mubr.bf16.mxu0 0
    %1867 = vmatmul.mubr.bf16.gmra.mrb[0].mxu0 %v1762
    %v1868 = vpop.f32.mrb[0].mxu0
    %v1869 = vadd.f32 %v1784, %v1868
    %v1870 = vpop.f32.mrb[0].mxu0
    %v1871 = vpop.f32.mrb[0].mxu0
    %v1872 = vpop.f32.mrb[0].mxu0
    %1873 = vdwg.mxu0
    %v1874 = vmax.f32 %v1869, 0.0
    %v1875 = vpack.c.bf16 %v1874, %v1874
    %v1876 = vld [vmem:[%s7] sm:$0xf]
    %v1877 = vld [vmem:[%s7 + $0x4] sm:$0xf]
    %v1878 = vld [vmem:[%s7 + $0x8] sm:$0xf]
    %v1879 = vld [vmem:[%s7 + $0xc] sm:$0xf]
    %v1880 = vld [vmem:[%s8] sm:$0x1]
    %v1882 = vlaneseq
    %v1883 = vshrl.u32 %v1882, 7
    %v1884 = vsub.s32 0, %v1883
    %v1885 = vrot.slane %v1880, %v1884
    %v1891 = vunpack.c.l.b16 %v1876
    %v1892 = vunpack.c.l.b16 %v1877
    %v1893 = vunpack.c.l.b16 %v1878
    %v1894 = vunpack.c.l.b16 %v1879
    %v1895 = vpack.c.b16 %v1892, %v1891
    %v1896 = vpack.c.b16 %v1894, %v1893
    %vm1899 = vcmask 261120
    %v1901 = vsel %vm1899, %v1875, 0
    %1903 = vmatprep.subr.bf16.mxu0 0
    %1904 = vmatpush1.bf16.msra.mxu0 %v1895
    %1905 = vmatprep.subr.bf16.mxu0 0
    %1906 = vmatpush1.bf16.msra.mxu0 %v1896
    %1907 = vmatprep.subr.bf16.mxu0 0
    %1908 = vmatpush1.bf16.msra.mxu0 0
    %1909 = vmatprep.subr.bf16.mxu0 0
    %1910 = vmatpush1.bf16.msra.mxu0 0
    %1911 = vmatprep.subr.bf16.mxu0 0
    %1912 = vmatpush1.bf16.msra.mxu0 0
    %1913 = vmatprep.subr.bf16.mxu0 0
    %1914 = vmatpush1.bf16.msra.mxu0 0
    %1915 = vmatprep.subr.bf16.mxu0 0
    %1916 = vmatpush1.bf16.msra.mxu0 0
    %1917 = vmatprep.subr.bf16.mxu0 0
    %1918 = vmatpush1.bf16.msra.mxu0 0
    %1919 = vmatprep.subr.bf16.mxu0 0
    %1920 = vmatpush1.bf16.msra.mxu0 0
    %1921 = vmatprep.subr.bf16.mxu0 0
    %1922 = vmatpush1.bf16.msra.mxu0 0
    %1923 = vmatprep.subr.bf16.mxu0 0
    %1924 = vmatpush1.bf16.msra.mxu0 0
    %1925 = vmatprep.subr.bf16.mxu0 0
    %1926 = vmatpush1.bf16.msra.mxu0 0
    %1927 = vmatprep.subr.bf16.mxu0 0
    %1928 = vmatpush1.bf16.msra.mxu0 0
    %1929 = vmatprep.subr.bf16.mxu0 0
    %1930 = vmatpush1.bf16.msra.mxu0 0
    %1931 = vmatprep.subr.bf16.mxu0 0
    %1932 = vmatpush1.bf16.msra.mxu0 0
    %1933 = vmatprep.subr.bf16.mxu0 0
    %1934 = vmatpush1.bf16.msra.mxu0 0
    %1935 = vmatprep.mubr.bf16.mxu0 0
    %1936 = vmatmul.mubr.bf16.gmra.mrb[0].mxu0 %v1901
    %v1937 = vpop.f32.mrb[0].mxu0
    %v1938 = vadd.f32 %v1885, %v1937
    %v1939 = vpop.f32.mrb[0].mxu0
    %v1940 = vpop.f32.mrb[0].mxu0
    %v1941 = vpop.f32.mrb[0].mxu0
    %1942 = vdwg.mxu0
    %vm1943 = vcmask 33792
    %1944 = vst.msk [vmem:[#allocation5] sm:$0x3] %vm1943, %v1938
    // Predicated region
    $region42: #{mlp_forward.1} parent=1 // pred_check
      _
    $region43: #{mlp_forward.1} parent=1 // pred_check_branch
      %1946 = sbr.rel (0) target = $region45
    $region44: #{mlp_forward.1} parent=1 // pred_region
      %s1948 = ssub.s32 32, 32
      %1949 = vsyncadd [#allocation4], %s1948
      %s1951 = sshll.u32 [#allocation5], 4
      %s1952 = int_to_ptr.vmem [resolvable:$true] %s1951
      %1954 = dma.vmem_to_hbm [thread:$0]  %s1952, 32, %s9, [#allocation4]
    $region45: #{mlp_forward.1} parent=1 // pred_fallthru
      _
    // Predicated region
    $region46: #{mlp_forward.1} parent=1 // pred_check
      _
    $region47: #{mlp_forward.1} parent=1 // pred_check_branch
      %1956 = sbr.rel (0) target = $region49
    $region48: #{mlp_forward.1} parent=1 // pred_region
      %1957 = dma.done [#allocation4], 32
    $region49: #{mlp_forward.1} parent=1 // pred_fallthru
      _
    %1958 = vsyncpa [#allocation3], 1
    %1959 = vsyncpa [#allocation4], 1

</llo_original>
